<compile_context>
chip_gen: v7x
topology: tpu7x:2x2x1
jax: 0.10.0
libtpu: 0.0.40
codegen_flags: <defaults>
</compile_context>

<pallas_src>
import functools

import jax
import jax.numpy as jnp
import numpy as np
from jax.experimental import pallas as pl
from jax.experimental.pallas import tpu as pltpu


# ----------------------------- fused Pallas kernels ----------------------------- #

def _branch2_kernel(x_ref, w1_ref, b1_ref, wd_ref, bd_ref, w2_ref, b2_ref,
                    o_ref, pad_ref, *, stride):
    """Fused: 1x1 conv+BN+ReLU -> depthwise 3x3 (stride)+BN -> 1x1 conv+BN+ReLU.

    One image per grid step.  BN scales are pre-folded into the weights; b* are the
    folded per-channel biases.  pad_ref is a zero-padded VMEM staging buffer for the
    depthwise halo (padding never touches HBM).
    """
    _, H, W, Cin = x_ref.shape
    _, Ho, Wo, Cout = o_ref.shape

    # --- stage 1: 1x1 conv (MXU) + folded BN + ReLU ---
    x = x_ref[...].reshape(H * W, Cin).astype(jnp.float32)
    y1 = jnp.dot(x, w1_ref[...], preferred_element_type=jnp.float32)
    y1 = jnp.maximum(y1 + b1_ref[...], 0.0)

    # --- stage the intermediate into the zero-padded VMEM scratch (in-kernel halo) ---
    pad_ref[...] = jnp.zeros_like(pad_ref)
    pad_ref[1:H + 1, 1:W + 1, :] = y1.reshape(H, W, Cout)

    # --- stage 2: depthwise 3x3 + folded BN; only strided output pixels computed ---
    acc = jnp.zeros((Ho, Wo, Cout), jnp.float32)
    for ki in range(3):
        for kj in range(3):
            if stride == 1:
                tap = pad_ref[ki:ki + Ho, kj:kj + Wo, :]
            else:
                tap = pad_ref[pl.ds(ki, Ho, stride), pl.ds(kj, Wo, stride), :]
            acc = acc + tap * wd_ref[3 * ki + kj:3 * ki + kj + 1, :]
    y2 = acc + bd_ref[...]

    # --- stage 3: 1x1 conv (MXU) + folded BN + ReLU ---
    y3 = jnp.dot(y2.reshape(Ho * Wo, Cout), w2_ref[...],
                 preferred_element_type=jnp.float32)
    y3 = jnp.maximum(y3 + b2_ref[...], 0.0)
    o_ref[0] = y3.reshape(Ho, Wo, Cout).astype(o_ref.dtype)


def _branch1_kernel(x_ref, wd_ref, bd_ref, w1_ref, b1_ref,
                    o_ref, pad_ref, *, stride):
    """Fused: depthwise 3x3 (stride)+BN -> 1x1 conv+BN+ReLU (stride>1 shortcut branch)."""
    _, H, W, Cin = x_ref.shape
    _, Ho, Wo, Cout = o_ref.shape

    pad_ref[...] = jnp.zeros_like(pad_ref)
    pad_ref[1:H + 1, 1:W + 1, :] = x_ref[0].astype(jnp.float32)

    acc = jnp.zeros((Ho, Wo, Cin), jnp.float32)
    for ki in range(3):
        for kj in range(3):
            if stride == 1:
                tap = pad_ref[ki:ki + Ho, kj:kj + Wo, :]
            else:
                tap = pad_ref[pl.ds(ki, Ho, stride), pl.ds(kj, Wo, stride), :]
            acc = acc + tap * wd_ref[3 * ki + kj:3 * ki + kj + 1, :]
    y1 = acc + bd_ref[...]

    y2 = jnp.dot(y1.reshape(Ho * Wo, Cin), w1_ref[...],
                 preferred_element_type=jnp.float32)
    y2 = jnp.maximum(y2 + b1_ref[...], 0.0)
    o_ref[0] = y2.reshape(Ho, Wo, Cout).astype(o_ref.dtype)


# ------------------------------ kernel call wrappers ----------------------------- #

def _conv_out(size, stride):
    # 3x3 conv, padding=1
    return (size - 1) // stride + 1


def _branch_call(kernel, x, weights, out_ch, pad_ch, stride, flops):
    """Common pallas_call plumbing for the two fused branch kernels."""
    N, H, W, _ = x.shape
    Ho, Wo = _conv_out(H, stride), _conv_out(W, stride)
    const2d = lambda n: (0, 0)

    bytes_accessed = 4 * (x.size + N * Ho * Wo * out_ch
                          + sum(int(w.size) for w in weights))

    in_specs = [pl.BlockSpec((1, H, W, x.shape[-1]), lambda n: (n, 0, 0, 0))]
    in_specs += [pl.BlockSpec(w.shape, const2d) for w in weights]

    return pl.pallas_call(
        functools.partial(kernel, stride=stride),
        out_shape=jax.ShapeDtypeStruct((N, Ho, Wo, out_ch), x.dtype),
        grid_spec=pltpu.PrefetchScalarGridSpec(
            num_scalar_prefetch=0,
            grid=(N,),
            in_specs=in_specs,
            out_specs=pl.BlockSpec((1, Ho, Wo, out_ch), lambda n: (n, 0, 0, 0)),
            scratch_shapes=[pltpu.VMEM((H + 2, W + 2, pad_ch), jnp.float32)],
        ),
        compiler_params=pltpu.CompilerParams(
            dimension_semantics=("parallel",),
            vmem_limit_bytes=32 * 1024 * 1024,
        ),
        cost_estimate=pl.CostEstimate(flops=int(flops), transcendentals=0,
                                      bytes_accessed=int(bytes_accessed)),
    )(x, *weights)


def fused_branch2(x, p, stride):
    """x: NHWC. pw1x1(Cin->Cout)+BN+ReLU -> dw3x3(stride)+BN -> pw1x1+BN+ReLU, one kernel."""
    N, H, W, Cin = x.shape
    Cout = p['w1'].shape[1]
    Ho, Wo = _conv_out(H, stride), _conv_out(W, stride)
    flops = 2 * N * H * W * Cin * Cout + 2 * N * Ho * Wo * (9 + Cout) * Cout
    weights = (p['w1'], p['b1'], p['wd'], p['bd'], p['w2'], p['b2'])
    return _branch_call(_branch2_kernel, x, weights, Cout, Cout, stride, flops)


def fused_branch1(x, p, stride):
    """x: NHWC. dw3x3(stride)+BN -> pw1x1(Cin->Cout)+BN+ReLU, one kernel."""
    N, H, W, Cin = x.shape
    Cout = p['w1'].shape[1]
    Ho, Wo = _conv_out(H, stride), _conv_out(W, stride)
    flops = 2 * N * Ho * Wo * (9 * Cin + Cin * Cout)
    weights = (p['wd'], p['bd'], p['w1'], p['b1'])
    return _branch_call(_branch1_kernel, x, weights, Cout, Cin, stride, flops)


# --------------------------------- module forward -------------------------------- #

def _channel_shuffle_nhwc(x, groups):
    N, H, W, C = x.shape
    x = x.reshape(N, H, W, groups, C // groups)
    x = jnp.transpose(x, (0, 1, 2, 4, 3))
    return x.reshape(N, H, W, C)


@functools.partial(jax.jit, static_argnames=("stride",))
def inverted_residual_forward(x_nchw, params, stride):
    x = jnp.transpose(x_nchw, (0, 2, 3, 1))              # NCHW -> NHWC
    if stride == 1:
        split = x.shape[-1] // 2
        x1, x2in = x[..., :split], x[..., split:]
        x2 = fused_branch2(x2in, params['branch2'], stride)
    else:
        x1 = fused_branch1(x, params['branch1'], stride)
        x2 = fused_branch2(x, params['branch2'], stride)
    out = jnp.concatenate([x1, x2], axis=-1)
    out = _channel_shuffle_nhwc(out, 2)
    return jnp.transpose(out, (0, 3, 1, 2))               # NHWC -> NCHW


# --------------------------- deterministic parameter init ------------------------ #

def _make_bn(key, c):
    k1, k2, k3, k4 = jax.random.split(key, 4)
    gamma = 1.0 + 0.1 * jax.random.normal(k1, (c,), jnp.float32)
    beta = 0.1 * jax.random.normal(k2, (c,), jnp.float32)
    mean = 0.1 * jax.random.normal(k3, (c,), jnp.float32)
    var = 0.5 + 0.5 * jnp.abs(jax.random.normal(k4, (c,), jnp.float32))
    scale = gamma / jnp.sqrt(var + 1e-5)
    bias = beta - mean * scale
    return scale, bias


def init_params(key, in_ch, out_ch, stride):
    """Deterministic params; eval-mode BN scale folded into conv weights at build time."""
    ks = jax.random.split(key, 10)
    p = {}

    # branch2: 1x1(in->out)+BN+ReLU, dw3x3(out, stride)+BN, 1x1(out->out)+BN+ReLU
    w1 = 0.3 * jax.random.normal(ks[0], (in_ch, out_ch), jnp.float32)
    wd = 0.3 * jax.random.normal(ks[1], (3, 3, out_ch), jnp.float32)
    w2 = 0.3 * jax.random.normal(ks[2], (out_ch, out_ch), jnp.float32)
    s1, b1 = _make_bn(ks[3], out_ch)
    sd, bd = _make_bn(ks[4], out_ch)
    s2, b2 = _make_bn(ks[5], out_ch)
    p['branch2'] = {
        'w1': w1 * s1[None, :],                      'b1': b1[None, :],
        'wd': wd.reshape(9, out_ch) * sd[None, :],   'bd': bd[None, :],
        'w2': w2 * s2[None, :],                      'b2': b2[None, :],
    }

    if stride > 1:
        # branch1: dw3x3(in, stride)+BN, 1x1(in->out)+BN+ReLU
        wd1 = 0.3 * jax.random.normal(ks[6], (3, 3, in_ch), jnp.float32)
        w11 = 0.3 * jax.random.normal(ks[7], (in_ch, out_ch), jnp.float32)
        sd1, bd1 = _make_bn(ks[8], in_ch)
        s11, b11 = _make_bn(ks[9], out_ch)
        p['branch1'] = {
            'wd': wd1.reshape(9, in_ch) * sd1[None, :], 'bd': bd1[None, :],
            'w1': w11 * s11[None, :],                   'b1': b11[None, :],
        }
    return p


# ------------------------------- pure-JAX reference ------------------------------ #

def _ref_pw(x, w, b, relu):
    y = jnp.einsum('nhwc,cd->nhwd', x, w) + b[0]
    return jnp.maximum(y, 0.0) if relu else y


def _ref_dw(x, w9c, b, stride):
    C = x.shape[-1]
    w = w9c.reshape(3, 3, 1, C)
    y = jax.lax.conv_general_dilated(
        x, w, window_strides=(stride, stride), padding=((1, 1), (1, 1)),
        dimension_numbers=('NHWC', 'HWIO', 'NHWC'), feature_group_count=C)
    return y + b[0]


def _ref_branch2(x, p, s):
    y = _ref_pw(x, p['w1'], p['b1'], True)
    y = _ref_dw(y, p['wd'], p['bd'], s)
    return _ref_pw(y, p['w2'], p['b2'], True)


def _ref_branch1(x, p, s):
    y = _ref_dw(x, p['wd'], p['bd'], s)
    return _ref_pw(y, p['w1'], p['b1'], True)


def inverted_residual_reference(x_nchw, params, stride):
    x = jnp.transpose(x_nchw, (0, 2, 3, 1))
    if stride == 1:
        split = x.shape[-1] // 2
        x1, x2in = x[..., :split], x[..., split:]
        x2 = _ref_branch2(x2in, params['branch2'], stride)
    else:
        x1 = _ref_branch1(x, params['branch1'], stride)
        x2 = _ref_branch2(x, params['branch2'], stride)
    out = jnp.concatenate([x1, x2], axis=-1)
    out = _channel_shuffle_nhwc(out, 2)
    return jnp.transpose(out, (0, 3, 1, 2))


# ---------------------------------------- main ----------------------------------- #

if __name__ == "__main__":
    key = jax.random.PRNGKey(0)
    k_x2, k_p2, k_x1, k_p1 = jax.random.split(key, 4)

    # Downsampling unit: InvertedResidual(in_channels=4, out_channels=8, stride=2)
    x_s2 = jax.random.normal(k_x2, (2, 4, 16, 16), jnp.float32)      # NCHW
    params_s2 = init_params(k_p2, 4, 8, 2)
    out_s2 = inverted_residual_forward(x_s2, params_s2, 2)
    jax.block_until_ready(out_s2)
    assert out_s2.shape == (2, 16, 8, 8)
    ref_s2 = inverted_residual_reference(x_s2, params_s2, 2)
    np.testing.assert_allclose(np.asarray(out_s2), np.asarray(ref_s2),
                               rtol=1e-4, atol=1e-4)

    # Basic unit: InvertedResidual(in_channels=4, out_channels=4, stride=1)
    # (stride=1 path splits the input in half, so the input carries 2*in_channels.)
    x_s1 = jax.random.normal(k_x1, (2, 8, 16, 16), jnp.float32)      # NCHW
    params_s1 = init_params(k_p1, 4, 4, 1)
    out_s1 = inverted_residual_forward(x_s1, params_s1, 1)
    jax.block_until_ready(out_s1)
    assert out_s1.shape == (2, 8, 16, 16)
    ref_s1 = inverted_residual_reference(x_s1, params_s1, 1)
    np.testing.assert_allclose(np.asarray(out_s1), np.asarray(ref_s1),
                               rtol=1e-4, atol=1e-4)

    print("KERNEL_OK")
</pallas_src>

<mosaic_0001>
module attributes {stable_mosaic.version = 11 : i64} {
  func.func @_branch2_kernel(%arg0: i32, %arg1: memref<1x16x16x4xf32, #tpu.memory_space<vmem>>, %arg2: memref<4x8xf32, #tpu.memory_space<vmem>>, %arg3: memref<1x8xf32, #tpu.memory_space<vmem>>, %arg4: memref<9x8xf32, #tpu.memory_space<vmem>>, %arg5: memref<1x8xf32, #tpu.memory_space<vmem>>, %arg6: memref<8x8xf32, #tpu.memory_space<vmem>>, %arg7: memref<1x8xf32, #tpu.memory_space<vmem>>, %arg8: memref<1x8x8x8xf32, #tpu.memory_space<vmem>>, %arg9: memref<18x18x8xf32, #tpu.memory_space<vmem>>) attributes {dimension_semantics = [#tpu.dimension_semantics<parallel>], iteration_bounds = array<i64: 2>, scalar_prefetch = 0 : i64, scratch_operands = 1 : i64, tpu.core_type = #tpu.core_type<tc>, window_params = [{transform_indices = @transform_0, window_bounds = array<i64: 1, 16, 16, 4>}, {pipeline_mode = #tpu.pipeline_mode<synchronous>, transform_indices = @transform_1, window_bounds = array<i64: 4, 8>}, {pipeline_mode = #tpu.pipeline_mode<synchronous>, transform_indices = @transform_2, window_bounds = array<i64: 1, 8>}, {pipeline_mode = #tpu.pipeline_mode<synchronous>, transform_indices = @transform_3, window_bounds = array<i64: 9, 8>}, {pipeline_mode = #tpu.pipeline_mode<synchronous>, transform_indices = @transform_4, window_bounds = array<i64: 1, 8>}, {pipeline_mode = #tpu.pipeline_mode<synchronous>, transform_indices = @transform_5, window_bounds = array<i64: 8, 8>}, {pipeline_mode = #tpu.pipeline_mode<synchronous>, transform_indices = @transform_6, window_bounds = array<i64: 1, 8>}, {transform_indices = @transform_7, window_bounds = array<i64: 1, 8, 8, 8>}]} {
    %c0 = arith.constant 0 : index
    %c0_0 = arith.constant 0 : index
    %c0_1 = arith.constant 0 : index
    %c0_2 = arith.constant 0 : index
    %0 = vector.load %arg1[%c0, %c0_0, %c0_1, %c0_2] : memref<1x16x16x4xf32, #tpu.memory_space<vmem>>, vector<1x16x16x4xf32>
    %1 = vector.shape_cast %0 : vector<1x16x16x4xf32> to vector<256x4xf32>
    %c0_3 = arith.constant 0 : index
    %c0_4 = arith.constant 0 : index
    %2 = vector.load %arg2[%c0_3, %c0_4] : memref<4x8xf32, #tpu.memory_space<vmem>>, vector<4x8xf32>
    %cst = arith.constant dense<0.000000e+00> : vector<256x8xf32>
    %3 = tpu.matmul %1, %2, %cst {dimension_numbers = #tpu.dot_dimension_numbers<[1], [0], [0], [1], [0, 0, 1, 1], [], []>} : vector<256x4xf32>, vector<4x8xf32>, vector<256x8xf32> -> vector<256x8xf32>
    %c0_5 = arith.constant 0 : index
    %c0_6 = arith.constant 0 : index
    %4 = vector.load %arg3[%c0_5, %c0_6] : memref<1x8xf32, #tpu.memory_space<vmem>>, vector<1x8xf32>
    %5 = vector.broadcast %4 : vector<1x8xf32> to vector<256x8xf32>
    %6 = arith.addf %3, %5 : vector<256x8xf32>
    %cst_7 = arith.constant 0.000000e+00 : f32
    %7 = vector.broadcast %cst_7 : f32 to vector<256x8xf32>
    %8 = arith.maximumf %6, %7 : vector<256x8xf32>
    %cst_8 = arith.constant 0.000000e+00 : f32
    %9 = vector.broadcast %cst_8 : f32 to vector<18x18x8xf32>
    %c0_9 = arith.constant 0 : index
    %c0_10 = arith.constant 0 : index
    %c0_11 = arith.constant 0 : index
    %10 = vector.load %arg9[%c0_9, %c0_10, %c0_11] : memref<18x18x8xf32, #tpu.memory_space<vmem>>, vector<18x18x8xf32>
    tpu.vector_store %arg9[%c0_9, %c0_10, %c0_11], %9 {strides = array<i32>} : memref<18x18x8xf32, #tpu.memory_space<vmem>>, vector<18x18x8xf32>,
    %11 = vector.shape_cast %8 : vector<256x8xf32> to vector<16x16x8xf32>
    %c1 = arith.constant 1 : index
    %c1_12 = arith.constant 1 : index
    %c0_13 = arith.constant 0 : index
    %12 = vector.load %arg9[%c1, %c1_12, %c0_13] : memref<18x18x8xf32, #tpu.memory_space<vmem>>, vector<16x16x8xf32>
    tpu.vector_store %arg9[%c1, %c1_12, %c0_13], %11 {strides = array<i32>} : memref<18x18x8xf32, #tpu.memory_space<vmem>>, vector<16x16x8xf32>,
    %cst_14 = arith.constant 0.000000e+00 : f32
    %13 = vector.broadcast %cst_14 : f32 to vector<8x8x8xf32>
    %c0_15 = arith.constant 0 : index
    %c0_16 = arith.constant 0 : index
    %c0_17 = arith.constant 0 : index
    %14 = tpu.strided_load %arg9[%c0_15, %c0_16, %c0_17] {strides = array<i32: 2, 2, 1>} : memref<18x18x8xf32, #tpu.memory_space<vmem>>, vector<8x8x8xf32>
    %c0_18 = arith.constant 0 : index
    %c0_19 = arith.constant 0 : index
    %15 = vector.load %arg4[%c0_18, %c0_19] : memref<9x8xf32, #tpu.memory_space<vmem>>, vector<1x8xf32>
    %16 = vector.shape_cast %15 : vector<1x8xf32> to vector<1x1x8xf32>
    %17 = vector.broadcast %16 : vector<1x1x8xf32> to vector<8x8x8xf32>
    %18 = arith.mulf %14, %17 : vector<8x8x8xf32>
    %19 = arith.addf %13, %18 : vector<8x8x8xf32>
    %c0_20 = arith.constant 0 : index
    %c1_21 = arith.constant 1 : index
    %c0_22 = arith.constant 0 : index
    %20 = tpu.strided_load %arg9[%c0_20, %c1_21, %c0_22] {strides = array<i32: 2, 2, 1>} : memref<18x18x8xf32, #tpu.memory_space<vmem>>, vector<8x8x8xf32>
    %c1_23 = arith.constant 1 : index
    %c0_24 = arith.constant 0 : index
    %21 = vector.load %arg4[%c1_23, %c0_24] : memref<9x8xf32, #tpu.memory_space<vmem>>, vector<1x8xf32>
    %22 = vector.shape_cast %21 : vector<1x8xf32> to vector<1x1x8xf32>
    %23 = vector.broadcast %22 : vector<1x1x8xf32> to vector<8x8x8xf32>
    %24 = arith.mulf %20, %23 : vector<8x8x8xf32>
    %25 = arith.addf %19, %24 : vector<8x8x8xf32>
    %c0_25 = arith.constant 0 : index
    %c2 = arith.constant 2 : index
    %c0_26 = arith.constant 0 : index
    %26 = tpu.strided_load %arg9[%c0_25, %c2, %c0_26] {strides = array<i32: 2, 2, 1>} : memref<18x18x8xf32, #tpu.memory_space<vmem>>, vector<8x8x8xf32>
    %c2_27 = arith.constant 2 : index
    %c0_28 = arith.constant 0 : index
    %27 = vector.load %arg4[%c2_27, %c0_28] : memref<9x8xf32, #tpu.memory_space<vmem>>, vector<1x8xf32>
    %28 = vector.shape_cast %27 : vector<1x8xf32> to vector<1x1x8xf32>
    %29 = vector.broadcast %28 : vector<1x1x8xf32> to vector<8x8x8xf32>
    %30 = arith.mulf %26, %29 : vector<8x8x8xf32>
    %31 = arith.addf %25, %30 : vector<8x8x8xf32>
    %c1_29 = arith.constant 1 : index
    %c0_30 = arith.constant 0 : index
    %c0_31 = arith.constant 0 : index
    %32 = tpu.strided_load %arg9[%c1_29, %c0_30, %c0_31] {strides = array<i32: 2, 2, 1>} : memref<18x18x8xf32, #tpu.memory_space<vmem>>, vector<8x8x8xf32>
    %c3 = arith.constant 3 : index
    %c0_32 = arith.constant 0 : index
    %33 = vector.load %arg4[%c3, %c0_32] : memref<9x8xf32, #tpu.memory_space<vmem>>, vector<1x8xf32>
    %34 = vector.shape_cast %33 : vector<1x8xf32> to vector<1x1x8xf32>
    %35 = vector.broadcast %34 : vector<1x1x8xf32> to vector<8x8x8xf32>
    %36 = arith.mulf %32, %35 : vector<8x8x8xf32>
    %37 = arith.addf %31, %36 : vector<8x8x8xf32>
    %c1_33 = arith.constant 1 : index
    %c1_34 = arith.constant 1 : index
    %c0_35 = arith.constant 0 : index
    %38 = tpu.strided_load %arg9[%c1_33, %c1_34, %c0_35] {strides = array<i32: 2, 2, 1>} : memref<18x18x8xf32, #tpu.memory_space<vmem>>, vector<8x8x8xf32>
    %c4 = arith.constant 4 : index
    %c0_36 = arith.constant 0 : index
    %39 = vector.load %arg4[%c4, %c0_36] : memref<9x8xf32, #tpu.memory_space<vmem>>, vector<1x8xf32>
    %40 = vector.shape_cast %39 : vector<1x8xf32> to vector<1x1x8xf32>
    %41 = vector.broadcast %40 : vector<1x1x8xf32> to vector<8x8x8xf32>
    %42 = arith.mulf %38, %41 : vector<8x8x8xf32>
    %43 = arith.addf %37, %42 : vector<8x8x8xf32>
    %c1_37 = arith.constant 1 : index
    %c2_38 = arith.constant 2 : index
    %c0_39 = arith.constant 0 : index
    %44 = tpu.strided_load %arg9[%c1_37, %c2_38, %c0_39] {strides = array<i32: 2, 2, 1>} : memref<18x18x8xf32, #tpu.memory_space<vmem>>, vector<8x8x8xf32>
    %c5 = arith.constant 5 : index
    %c0_40 = arith.constant 0 : index
    %45 = vector.load %arg4[%c5, %c0_40] : memref<9x8xf32, #tpu.memory_space<vmem>>, vector<1x8xf32>
    %46 = vector.shape_cast %45 : vector<1x8xf32> to vector<1x1x8xf32>
    %47 = vector.broadcast %46 : vector<1x1x8xf32> to vector<8x8x8xf32>
    %48 = arith.mulf %44, %47 : vector<8x8x8xf32>
    %49 = arith.addf %43, %48 : vector<8x8x8xf32>
    %c2_41 = arith.constant 2 : index
    %c0_42 = arith.constant 0 : index
    %c0_43 = arith.constant 0 : index
    %50 = tpu.strided_load %arg9[%c2_41, %c0_42, %c0_43] {strides = array<i32: 2, 2, 1>} : memref<18x18x8xf32, #tpu.memory_space<vmem>>, vector<8x8x8xf32>
    %c6 = arith.constant 6 : index
    %c0_44 = arith.constant 0 : index
    %51 = vector.load %arg4[%c6, %c0_44] : memref<9x8xf32, #tpu.memory_space<vmem>>, vector<1x8xf32>
    %52 = vector.shape_cast %51 : vector<1x8xf32> to vector<1x1x8xf32>
    %53 = vector.broadcast %52 : vector<1x1x8xf32> to vector<8x8x8xf32>
    %54 = arith.mulf %50, %53 : vector<8x8x8xf32>
    %55 = arith.addf %49, %54 : vector<8x8x8xf32>
    %c2_45 = arith.constant 2 : index
    %c1_46 = arith.constant 1 : index
    %c0_47 = arith.constant 0 : index
    %56 = tpu.strided_load %arg9[%c2_45, %c1_46, %c0_47] {strides = array<i32: 2, 2, 1>} : memref<18x18x8xf32, #tpu.memory_space<vmem>>, vector<8x8x8xf32>
    %c7 = arith.constant 7 : index
    %c0_48 = arith.constant 0 : index
    %57 = vector.load %arg4[%c7, %c0_48] : memref<9x8xf32, #tpu.memory_space<vmem>>, vector<1x8xf32>
    %58 = vector.shape_cast %57 : vector<1x8xf32> to vector<1x1x8xf32>
    %59 = vector.broadcast %58 : vector<1x1x8xf32> to vector<8x8x8xf32>
    %60 = arith.mulf %56, %59 : vector<8x8x8xf32>
    %61 = arith.addf %55, %60 : vector<8x8x8xf32>
    %c2_49 = arith.constant 2 : index
    %c2_50 = arith.constant 2 : index
    %c0_51 = arith.constant 0 : index
    %62 = tpu.strided_load %arg9[%c2_49, %c2_50, %c0_51] {strides = array<i32: 2, 2, 1>} : memref<18x18x8xf32, #tpu.memory_space<vmem>>, vector<8x8x8xf32>
    %c8 = arith.constant 8 : index
    %c0_52 = arith.constant 0 : index
    %63 = vector.load %arg4[%c8, %c0_52] : memref<9x8xf32, #tpu.memory_space<vmem>>, vector<1x8xf32>
    %64 = vector.shape_cast %63 : vector<1x8xf32> to vector<1x1x8xf32>
    %65 = vector.broadcast %64 : vector<1x1x8xf32> to vector<8x8x8xf32>
    %66 = arith.mulf %62, %65 : vector<8x8x8xf32>
    %67 = arith.addf %61, %66 : vector<8x8x8xf32>
    %c0_53 = arith.constant 0 : index
    %c0_54 = arith.constant 0 : index
    %68 = vector.load %arg5[%c0_53, %c0_54] : memref<1x8xf32, #tpu.memory_space<vmem>>, vector<1x8xf32>
    %69 = vector.shape_cast %68 : vector<1x8xf32> to vector<1x1x8xf32>
    %70 = vector.broadcast %69 : vector<1x1x8xf32> to vector<8x8x8xf32>
    %71 = arith.addf %67, %70 : vector<8x8x8xf32>
    %72 = vector.shape_cast %71 : vector<8x8x8xf32> to vector<64x8xf32>
    %c0_55 = arith.constant 0 : index
    %c0_56 = arith.constant 0 : index
    %73 = vector.load %arg6[%c0_55, %c0_56] : memref<8x8xf32, #tpu.memory_space<vmem>>, vector<8x8xf32>
    %cst_57 = arith.constant dense<0.000000e+00> : vector<64x8xf32>
    %74 = tpu.matmul %72, %73, %cst_57 {dimension_numbers = #tpu.dot_dimension_numbers<[1], [0], [0], [1], [0, 0, 1, 1], [], []>} : vector<64x8xf32>, vector<8x8xf32>, vector<64x8xf32> -> vector<64x8xf32>
    %c0_58 = arith.constant 0 : index
    %c0_59 = arith.constant 0 : index
    %75 = vector.load %arg7[%c0_58, %c0_59] : memref<1x8xf32, #tpu.memory_space<vmem>>, vector<1x8xf32>
    %76 = vector.broadcast %75 : vector<1x8xf32> to vector<64x8xf32>
    %77 = arith.addf %74, %76 : vector<64x8xf32>
    %cst_60 = arith.constant 0.000000e+00 : f32
    %78 = vector.broadcast %cst_60 : f32 to vector<64x8xf32>
    %79 = arith.maximumf %77, %78 : vector<64x8xf32>
    %80 = vector.shape_cast %79 : vector<64x8xf32> to vector<8x8x8xf32>
    %c0_61 = arith.constant 0 : index
    %c0_62 = arith.constant 0 : index
    %c0_63 = arith.constant 0 : index
    %c0_64 = arith.constant 0 : index
    %81 = vector.load %arg8[%c0_61, %c0_62, %c0_63, %c0_64] : memref<1x8x8x8xf32, #tpu.memory_space<vmem>>, vector<1x8x8x8xf32>
    %82 = vector.shape_cast %81 : vector<1x8x8x8xf32> to vector<8x8x8xf32>
    %83 = vector.shape_cast %80 : vector<8x8x8xf32> to vector<1x8x8x8xf32>
    tpu.vector_store %arg8[%c0_61, %c0_62, %c0_63, %c0_64], %83 {strides = array<i32>} : memref<1x8x8x8xf32, #tpu.memory_space<vmem>>, vector<1x8x8x8xf32>,
    return
  }
  func.func @transform_0(%arg0: i32) -> (i32, i32, i32, i32) {
    %c0_i32 = arith.constant 0 : i32
    %c0_i32_0 = arith.constant 0 : i32
    %c0_i32_1 = arith.constant 0 : i32
    %c0_i32_2 = arith.constant 0 : i32
    return %arg0, %c0_i32, %c0_i32_0, %c0_i32_1 : i32, i32, i32, i32
  }
  func.func @transform_1(%arg0: i32) -> (i32, i32) {
    %c0_i32 = arith.constant 0 : i32
    %c0_i32_0 = arith.constant 0 : i32
    %c0_i32_1 = arith.constant 0 : i32
    return %c0_i32, %c0_i32_0 : i32, i32
  }
  func.func @transform_2(%arg0: i32) -> (i32, i32) {
    %c0_i32 = arith.constant 0 : i32
    %c0_i32_0 = arith.constant 0 : i32
    %c0_i32_1 = arith.constant 0 : i32
    return %c0_i32, %c0_i32_0 : i32, i32
  }
  func.func @transform_3(%arg0: i32) -> (i32, i32) {
    %c0_i32 = arith.constant 0 : i32
    %c0_i32_0 = arith.constant 0 : i32
    %c0_i32_1 = arith.constant 0 : i32
    return %c0_i32, %c0_i32_0 : i32, i32
  }
  func.func @transform_4(%arg0: i32) -> (i32, i32) {
    %c0_i32 = arith.constant 0 : i32
    %c0_i32_0 = arith.constant 0 : i32
    %c0_i32_1 = arith.constant 0 : i32
    return %c0_i32, %c0_i32_0 : i32, i32
  }
  func.func @transform_5(%arg0: i32) -> (i32, i32) {
    %c0_i32 = arith.constant 0 : i32
    %c0_i32_0 = arith.constant 0 : i32
    %c0_i32_1 = arith.constant 0 : i32
    return %c0_i32, %c0_i32_0 : i32, i32
  }
  func.func @transform_6(%arg0: i32) -> (i32, i32) {
    %c0_i32 = arith.constant 0 : i32
    %c0_i32_0 = arith.constant 0 : i32
    %c0_i32_1 = arith.constant 0 : i32
    return %c0_i32, %c0_i32_0 : i32, i32
  }
  func.func @transform_7(%arg0: i32) -> (i32, i32, i32, i32) {
    %c0_i32 = arith.constant 0 : i32
    %c0_i32_0 = arith.constant 0 : i32
    %c0_i32_1 = arith.constant 0 : i32
    %c0_i32_2 = arith.constant 0 : i32
    return %arg0, %c0_i32, %c0_i32_0, %c0_i32_1 : i32, i32, i32, i32
  }
}

module attributes {stable_mosaic.version = 11 : i64} {
  func.func @_branch1_kernel(%arg0: i32, %arg1: memref<1x16x16x4xf32, #tpu.memory_space<vmem>>, %arg2: memref<9x4xf32, #tpu.memory_space<vmem>>, %arg3: memref<1x4xf32, #tpu.memory_space<vmem>>, %arg4: memref<4x8xf32, #tpu.memory_space<vmem>>, %arg5: memref<1x8xf32, #tpu.memory_space<vmem>>, %arg6: memref<1x8x8x8xf32, #tpu.memory_space<vmem>>, %arg7: memref<18x18x4xf32, #tpu.memory_space<vmem>>) attributes {dimension_semantics = [#tpu.dimension_semantics<parallel>], iteration_bounds = array<i64: 2>, scalar_prefetch = 0 : i64, scratch_operands = 1 : i64, tpu.core_type = #tpu.core_type<tc>, window_params = [{transform_indices = @transform_0, window_bounds = array<i64: 1, 16, 16, 4>}, {pipeline_mode = #tpu.pipeline_mode<synchronous>, transform_indices = @transform_1, window_bounds = array<i64: 9, 4>}, {pipeline_mode = #tpu.pipeline_mode<synchronous>, transform_indices = @transform_2, window_bounds = array<i64: 1, 4>}, {pipeline_mode = #tpu.pipeline_mode<synchronous>, transform_indices = @transform_3, window_bounds = array<i64: 4, 8>}, {pipeline_mode = #tpu.pipeline_mode<synchronous>, transform_indices = @transform_4, window_bounds = array<i64: 1, 8>}, {transform_indices = @transform_5, window_bounds = array<i64: 1, 8, 8, 8>}]} {
    %cst = arith.constant 0.000000e+00 : f32
    %0 = vector.broadcast %cst : f32 to vector<18x18x4xf32>
    %c0 = arith.constant 0 : index
    %c0_0 = arith.constant 0 : index
    %c0_1 = arith.constant 0 : index
    %1 = vector.load %arg7[%c0, %c0_0, %c0_1] : memref<18x18x4xf32, #tpu.memory_space<vmem>>, vector<18x18x4xf32>
    tpu.vector_store %arg7[%c0, %c0_0, %c0_1], %0 {strides = array<i32>} : memref<18x18x4xf32, #tpu.memory_space<vmem>>, vector<18x18x4xf32>,
    %c0_2 = arith.constant 0 : index
    %c0_3 = arith.constant 0 : index
    %c0_4 = arith.constant 0 : index
    %c0_5 = arith.constant 0 : index
    %2 = vector.load %arg1[%c0_2, %c0_3, %c0_4, %c0_5] : memref<1x16x16x4xf32, #tpu.memory_space<vmem>>, vector<1x16x16x4xf32>
    %3 = vector.shape_cast %2 : vector<1x16x16x4xf32> to vector<16x16x4xf32>
    %c1 = arith.constant 1 : index
    %c1_6 = arith.constant 1 : index
    %c0_7 = arith.constant 0 : index
    %4 = vector.load %arg7[%c1, %c1_6, %c0_7] : memref<18x18x4xf32, #tpu.memory_space<vmem>>, vector<16x16x4xf32>
    tpu.vector_store %arg7[%c1, %c1_6, %c0_7], %3 {strides = array<i32>} : memref<18x18x4xf32, #tpu.memory_space<vmem>>, vector<16x16x4xf32>,
    %cst_8 = arith.constant 0.000000e+00 : f32
    %5 = vector.broadcast %cst_8 : f32 to vector<8x8x4xf32>
    %c0_9 = arith.constant 0 : index
    %c0_10 = arith.constant 0 : index
    %c0_11 = arith.constant 0 : index
    %6 = tpu.strided_load %arg7[%c0_9, %c0_10, %c0_11] {strides = array<i32: 2, 2, 1>} : memref<18x18x4xf32, #tpu.memory_space<vmem>>, vector<8x8x4xf32>
    %c0_12 = arith.constant 0 : index
    %c0_13 = arith.constant 0 : index
    %7 = vector.load %arg2[%c0_12, %c0_13] : memref<9x4xf32, #tpu.memory_space<vmem>>, vector<1x4xf32>
    %8 = vector.shape_cast %7 : vector<1x4xf32> to vector<1x1x4xf32>
    %9 = vector.broadcast %8 : vector<1x1x4xf32> to vector<8x8x4xf32>
    %10 = arith.mulf %6, %9 : vector<8x8x4xf32>
    %11 = arith.addf %5, %10 : vector<8x8x4xf32>
    %c0_14 = arith.constant 0 : index
    %c1_15 = arith.constant 1 : index
    %c0_16 = arith.constant 0 : index
    %12 = tpu.strided_load %arg7[%c0_14, %c1_15, %c0_16] {strides = array<i32: 2, 2, 1>} : memref<18x18x4xf32, #tpu.memory_space<vmem>>, vector<8x8x4xf32>
    %c1_17 = arith.constant 1 : index
    %c0_18 = arith.constant 0 : index
    %13 = vector.load %arg2[%c1_17, %c0_18] : memref<9x4xf32, #tpu.memory_space<vmem>>, vector<1x4xf32>
    %14 = vector.shape_cast %13 : vector<1x4xf32> to vector<1x1x4xf32>
    %15 = vector.broadcast %14 : vector<1x1x4xf32> to vector<8x8x4xf32>
    %16 = arith.mulf %12, %15 : vector<8x8x4xf32>
    %17 = arith.addf %11, %16 : vector<8x8x4xf32>
    %c0_19 = arith.constant 0 : index
    %c2 = arith.constant 2 : index
    %c0_20 = arith.constant 0 : index
    %18 = tpu.strided_load %arg7[%c0_19, %c2, %c0_20] {strides = array<i32: 2, 2, 1>} : memref<18x18x4xf32, #tpu.memory_space<vmem>>, vector<8x8x4xf32>
    %c2_21 = arith.constant 2 : index
    %c0_22 = arith.constant 0 : index
    %19 = vector.load %arg2[%c2_21, %c0_22] : memref<9x4xf32, #tpu.memory_space<vmem>>, vector<1x4xf32>
    %20 = vector.shape_cast %19 : vector<1x4xf32> to vector<1x1x4xf32>
    %21 = vector.broadcast %20 : vector<1x1x4xf32> to vector<8x8x4xf32>
    %22 = arith.mulf %18, %21 : vector<8x8x4xf32>
    %23 = arith.addf %17, %22 : vector<8x8x4xf32>
    %c1_23 = arith.constant 1 : index
    %c0_24 = arith.constant 0 : index
    %c0_25 = arith.constant 0 : index
    %24 = tpu.strided_load %arg7[%c1_23, %c0_24, %c0_25] {strides = array<i32: 2, 2, 1>} : memref<18x18x4xf32, #tpu.memory_space<vmem>>, vector<8x8x4xf32>
    %c3 = arith.constant 3 : index
    %c0_26 = arith.constant 0 : index
    %25 = vector.load %arg2[%c3, %c0_26] : memref<9x4xf32, #tpu.memory_space<vmem>>, vector<1x4xf32>
    %26 = vector.shape_cast %25 : vector<1x4xf32> to vector<1x1x4xf32>
    %27 = vector.broadcast %26 : vector<1x1x4xf32> to vector<8x8x4xf32>
    %28 = arith.mulf %24, %27 : vector<8x8x4xf32>
    %29 = arith.addf %23, %28 : vector<8x8x4xf32>
    %c1_27 = arith.constant 1 : index
    %c1_28 = arith.constant 1 : index
    %c0_29 = arith.constant 0 : index
    %30 = tpu.strided_load %arg7[%c1_27, %c1_28, %c0_29] {strides = array<i32: 2, 2, 1>} : memref<18x18x4xf32, #tpu.memory_space<vmem>>, vector<8x8x4xf32>
    %c4 = arith.constant 4 : index
    %c0_30 = arith.constant 0 : index
    %31 = vector.load %arg2[%c4, %c0_30] : memref<9x4xf32, #tpu.memory_space<vmem>>, vector<1x4xf32>
    %32 = vector.shape_cast %31 : vector<1x4xf32> to vector<1x1x4xf32>
    %33 = vector.broadcast %32 : vector<1x1x4xf32> to vector<8x8x4xf32>
    %34 = arith.mulf %30, %33 : vector<8x8x4xf32>
    %35 = arith.addf %29, %34 : vector<8x8x4xf32>
    %c1_31 = arith.constant 1 : index
    %c2_32 = arith.constant 2 : index
    %c0_33 = arith.constant 0 : index
    %36 = tpu.strided_load %arg7[%c1_31, %c2_32, %c0_33] {strides = array<i32: 2, 2, 1>} : memref<18x18x4xf32, #tpu.memory_space<vmem>>, vector<8x8x4xf32>
    %c5 = arith.constant 5 : index
    %c0_34 = arith.constant 0 : index
    %37 = vector.load %arg2[%c5, %c0_34] : memref<9x4xf32, #tpu.memory_space<vmem>>, vector<1x4xf32>
    %38 = vector.shape_cast %37 : vector<1x4xf32> to vector<1x1x4xf32>
    %39 = vector.broadcast %38 : vector<1x1x4xf32> to vector<8x8x4xf32>
    %40 = arith.mulf %36, %39 : vector<8x8x4xf32>
    %41 = arith.addf %35, %40 : vector<8x8x4xf32>
    %c2_35 = arith.constant 2 : index
    %c0_36 = arith.constant 0 : index
    %c0_37 = arith.constant 0 : index
    %42 = tpu.strided_load %arg7[%c2_35, %c0_36, %c0_37] {strides = array<i32: 2, 2, 1>} : memref<18x18x4xf32, #tpu.memory_space<vmem>>, vector<8x8x4xf32>
    %c6 = arith.constant 6 : index
    %c0_38 = arith.constant 0 : index
    %43 = vector.load %arg2[%c6, %c0_38] : memref<9x4xf32, #tpu.memory_space<vmem>>, vector<1x4xf32>
    %44 = vector.shape_cast %43 : vector<1x4xf32> to vector<1x1x4xf32>
    %45 = vector.broadcast %44 : vector<1x1x4xf32> to vector<8x8x4xf32>
    %46 = arith.mulf %42, %45 : vector<8x8x4xf32>
    %47 = arith.addf %41, %46 : vector<8x8x4xf32>
    %c2_39 = arith.constant 2 : index
    %c1_40 = arith.constant 1 : index
    %c0_41 = arith.constant 0 : index
    %48 = tpu.strided_load %arg7[%c2_39, %c1_40, %c0_41] {strides = array<i32: 2, 2, 1>} : memref<18x18x4xf32, #tpu.memory_space<vmem>>, vector<8x8x4xf32>
    %c7 = arith.constant 7 : index
    %c0_42 = arith.constant 0 : index
    %49 = vector.load %arg2[%c7, %c0_42] : memref<9x4xf32, #tpu.memory_space<vmem>>, vector<1x4xf32>
    %50 = vector.shape_cast %49 : vector<1x4xf32> to vector<1x1x4xf32>
    %51 = vector.broadcast %50 : vector<1x1x4xf32> to vector<8x8x4xf32>
    %52 = arith.mulf %48, %51 : vector<8x8x4xf32>
    %53 = arith.addf %47, %52 : vector<8x8x4xf32>
    %c2_43 = arith.constant 2 : index
    %c2_44 = arith.constant 2 : index
    %c0_45 = arith.constant 0 : index
    %54 = tpu.strided_load %arg7[%c2_43, %c2_44, %c0_45] {strides = array<i32: 2, 2, 1>} : memref<18x18x4xf32, #tpu.memory_space<vmem>>, vector<8x8x4xf32>
    %c8 = arith.constant 8 : index
    %c0_46 = arith.constant 0 : index
    %55 = vector.load %arg2[%c8, %c0_46] : memref<9x4xf32, #tpu.memory_space<vmem>>, vector<1x4xf32>
    %56 = vector.shape_cast %55 : vector<1x4xf32> to vector<1x1x4xf32>
    %57 = vector.broadcast %56 : vector<1x1x4xf32> to vector<8x8x4xf32>
    %58 = arith.mulf %54, %57 : vector<8x8x4xf32>
    %59 = arith.addf %53, %58 : vector<8x8x4xf32>
    %c0_47 = arith.constant 0 : index
    %c0_48 = arith.constant 0 : index
    %60 = vector.load %arg3[%c0_47, %c0_48] : memref<1x4xf32, #tpu.memory_space<vmem>>, vector<1x4xf32>
    %61 = vector.shape_cast %60 : vector<1x4xf32> to vector<1x1x4xf32>
    %62 = vector.broadcast %61 : vector<1x1x4xf32> to vector<8x8x4xf32>
    %63 = arith.addf %59, %62 : vector<8x8x4xf32>
    %64 = vector.shape_cast %63 : vector<8x8x4xf32> to vector<64x4xf32>
    %c0_49 = arith.constant 0 : index
    %c0_50 = arith.constant 0 : index
    %65 = vector.load %arg4[%c0_49, %c0_50] : memref<4x8xf32, #tpu.memory_space<vmem>>, vector<4x8xf32>
    %cst_51 = arith.constant dense<0.000000e+00> : vector<64x8xf32>
    %66 = tpu.matmul %64, %65, %cst_51 {dimension_numbers = #tpu.dot_dimension_numbers<[1], [0], [0], [1], [0, 0, 1, 1], [], []>} : vector<64x4xf32>, vector<4x8xf32>, vector<64x8xf32> -> vector<64x8xf32>
    %c0_52 = arith.constant 0 : index
    %c0_53 = arith.constant 0 : index
    %67 = vector.load %arg5[%c0_52, %c0_53] : memref<1x8xf32, #tpu.memory_space<vmem>>, vector<1x8xf32>
    %68 = vector.broadcast %67 : vector<1x8xf32> to vector<64x8xf32>
    %69 = arith.addf %66, %68 : vector<64x8xf32>
    %cst_54 = arith.constant 0.000000e+00 : f32
    %70 = vector.broadcast %cst_54 : f32 to vector<64x8xf32>
    %71 = arith.maximumf %69, %70 : vector<64x8xf32>
    %72 = vector.shape_cast %71 : vector<64x8xf32> to vector<8x8x8xf32>
    %c0_55 = arith.constant 0 : index
    %c0_56 = arith.constant 0 : index
    %c0_57 = arith.constant 0 : index
    %c0_58 = arith.constant 0 : index
    %73 = vector.load %arg6[%c0_55, %c0_56, %c0_57, %c0_58] : memref<1x8x8x8xf32, #tpu.memory_space<vmem>>, vector<1x8x8x8xf32>
    %74 = vector.shape_cast %73 : vector<1x8x8x8xf32> to vector<8x8x8xf32>
    %75 = vector.shape_cast %72 : vector<8x8x8xf32> to vector<1x8x8x8xf32>
    tpu.vector_store %arg6[%c0_55, %c0_56, %c0_57, %c0_58], %75 {strides = array<i32>} : memref<1x8x8x8xf32, #tpu.memory_space<vmem>>, vector<1x8x8x8xf32>,
    return
  }
  func.func @transform_0(%arg0: i32) -> (i32, i32, i32, i32) {
    %c0_i32 = arith.constant 0 : i32
    %c0_i32_0 = arith.constant 0 : i32
    %c0_i32_1 = arith.constant 0 : i32
    %c0_i32_2 = arith.constant 0 : i32
    return %arg0, %c0_i32, %c0_i32_0, %c0_i32_1 : i32, i32, i32, i32
  }
  func.func @transform_1(%arg0: i32) -> (i32, i32) {
    %c0_i32 = arith.constant 0 : i32
    %c0_i32_0 = arith.constant 0 : i32
    %c0_i32_1 = arith.constant 0 : i32
    return %c0_i32, %c0_i32_0 : i32, i32
  }
  func.func @transform_2(%arg0: i32) -> (i32, i32) {
    %c0_i32 = arith.constant 0 : i32
    %c0_i32_0 = arith.constant 0 : i32
    %c0_i32_1 = arith.constant 0 : i32
    return %c0_i32, %c0_i32_0 : i32, i32
  }
  func.func @transform_3(%arg0: i32) -> (i32, i32) {
    %c0_i32 = arith.constant 0 : i32
    %c0_i32_0 = arith.constant 0 : i32
    %c0_i32_1 = arith.constant 0 : i32
    return %c0_i32, %c0_i32_0 : i32, i32
  }
  func.func @transform_4(%arg0: i32) -> (i32, i32) {
    %c0_i32 = arith.constant 0 : i32
    %c0_i32_0 = arith.constant 0 : i32
    %c0_i32_1 = arith.constant 0 : i32
    return %c0_i32, %c0_i32_0 : i32, i32
  }
  func.func @transform_5(%arg0: i32) -> (i32, i32, i32, i32) {
    %c0_i32 = arith.constant 0 : i32
    %c0_i32_0 = arith.constant 0 : i32
    %c0_i32_1 = arith.constant 0 : i32
    %c0_i32_2 = arith.constant 0 : i32
    return %arg0, %c0_i32, %c0_i32_0, %c0_i32_1 : i32, i32, i32, i32
  }
}

</mosaic_0001>

<llo_original>
// kernel: inverted_residual_forward.2
$region0: #{inverted_residual_forward.2}
  #allocation0 [shape = 'u32[]', space=smem, size = 0x4, offset = 0x4, fixed_abs, tag = 'smem constant byte address 0x4 - core index']
  #allocation1 [shape = 'u32[144,128]{1,0:T(1,128)}', space=vmem, size = 0x12000, scoped, tag = 'internal scratch']
  #allocation2 [shape = 'f32[18,18,4]{2,1,0:T(8,128)}', space=vmem, size = 0x36000, scoped, tag = 'scratch operand']
  %s0 = inlined_call_operand.vmem [shape: f32[2,16,16,4], index: 0, kind: input, shape index: {}]
  %s1 = inlined_call_operand.vmem [shape: f32[9,4], index: 1, kind: input, shape index: {}]
  %s2 = inlined_call_operand.vmem [shape: f32[1,4], index: 2, kind: input, shape index: {}]
  %s3 = inlined_call_operand.vmem [shape: f32[4,8], index: 3, kind: input, shape index: {}]
  %s4 = inlined_call_operand.vmem [shape: f32[1,8], index: 4, kind: input, shape index: {}]
  %s5 = inlined_call_operand.vmem [shape: f32[2,8,8,8], index: 5, kind: output, shape index: {}]
  %s6 = sld [smem:[#allocation0]]
  $region53: #{inverted_residual_forward.2} parent=0
    _
  %s8 = ssub.s32 1, %s6
  %s9 = scalar_select 0, %s8, %s6
  loop: start=0, step=1, limit=4
  $region2: #{inverted_residual_forward.2} parent=0 // loop_pre_header
    _
  $region3: #{inverted_residual_forward.2} parent=0 // loop_header
    %s11 = sphi 0, %s15
    %p12 = scmp.ge.s32.totalorder %s11, 4
    %s21 = sphi 0, %s23
    %s24 = sphi 0, %s21
    %s25 = sphi 0, %s24
    %s41 = sphi 0, %s25
    %s45 = sphi 0, %s45
    %s47 = sphi 0, %s45
    %s48 = sphi 0, %s47
    %s62 = sphi 0, %s48
    %s66 = sphi 0, %s66
    %s68 = sphi 0, %s66
    %s69 = sphi 0, %s68
    %s83 = sphi 0, %s69
    %s87 = sphi 0, %s87
    %s89 = sphi 0, %s87
    %s90 = sphi 0, %s89
    %s104 = sphi 0, %s90
    %s108 = sphi 0, %s108
    %s110 = sphi 0, %s108
    %s111 = sphi 0, %s110
    %s125 = sphi 0, %s111
    %s131 = sphi 0, %s133
    %s134 = sphi 0, %s131
    %s135 = sphi 0, %s134
    %s151 = sphi 0, %s135
  $region4: #{inverted_residual_forward.2} parent=0 // loop_header_branch
    %14 = sbr.rel (%p12) target = $region8
  $region5: #{inverted_residual_forward.2} parent=0 // loop_body
    %s16 = ssub.s32 %s11, 1
    %s17 = ssub.s32 %s11, 2
    %s18 = sadd.s32 %s11, 1
    %s19 = ssub.s32 %s11, %s18
    %p20 = scmp.eq.s32.totalorder %s19, 0
    %s22 = sadd.s32 %s21, 1
    %s23 = scalar_select %p20, %s21, %s22
    %p26 = pneg %p20
    %p27 = scmp.eq.s32.totalorder %s11, 1
    %p28 = por %p26, %p27
    %p29 = scmp.ne.s32.totalorder %s21, %s24
    %p30 = scmp.eq.s32.totalorder %s11, 0
    %p31 = por %p29, %p30
    %p32 = scmp.ne.s32.totalorder %s21, %s24
    %p33 = scmp.eq.s32.totalorder %s16, 1
    %p34 = por %p32, %p33
    %p35 = scmp.ne.s32.totalorder %s24, %s25
    %p36 = scmp.eq.s32.totalorder %s16, 0
    %p37 = por %p35, %p36
    %p38 = scmp.ne.s32.totalorder %s24, %s25
    %p39 = scmp.eq.s32.totalorder %s17, 1
    %p40 = por %p38, %p39
    %p42 = scmp.ne.s32.totalorder %s25, %s41
    %p43 = scmp.eq.s32.totalorder %s17, 0
    %p44 = por %p42, %p43
    %s46 = sadd.s32 %s45, 1
    %p49 = scmp.eq.s32.totalorder %s11, 1
    %p50 = scmp.ne.s32.totalorder %s45, %s47
    %p51 = scmp.eq.s32.totalorder %s11, 0
    %p52 = por %p50, %p51
    %p53 = scmp.ne.s32.totalorder %s45, %s47
    %p54 = scmp.eq.s32.totalorder %s16, 1
    %p55 = por %p53, %p54
    %p56 = scmp.ne.s32.totalorder %s47, %s48
    %p57 = scmp.eq.s32.totalorder %s16, 0
    %p58 = por %p56, %p57
    %p59 = scmp.ne.s32.totalorder %s47, %s48
    %p60 = scmp.eq.s32.totalorder %s17, 1
    %p61 = por %p59, %p60
    %p63 = scmp.ne.s32.totalorder %s48, %s62
    %p64 = scmp.eq.s32.totalorder %s17, 0
    %p65 = por %p63, %p64
    %s67 = sadd.s32 %s66, 1
    %p70 = scmp.eq.s32.totalorder %s11, 1
    %p71 = scmp.ne.s32.totalorder %s66, %s68
    %p72 = scmp.eq.s32.totalorder %s11, 0
    %p73 = por %p71, %p72
    %p74 = scmp.ne.s32.totalorder %s66, %s68
    %p75 = scmp.eq.s32.totalorder %s16, 1
    %p76 = por %p74, %p75
    %p77 = scmp.ne.s32.totalorder %s68, %s69
    %p78 = scmp.eq.s32.totalorder %s16, 0
    %p79 = por %p77, %p78
    %p80 = scmp.ne.s32.totalorder %s68, %s69
    %p81 = scmp.eq.s32.totalorder %s17, 1
    %p82 = por %p80, %p81
    %p84 = scmp.ne.s32.totalorder %s69, %s83
    %p85 = scmp.eq.s32.totalorder %s17, 0
    %p86 = por %p84, %p85
    %s88 = sadd.s32 %s87, 1
    %p91 = scmp.eq.s32.totalorder %s11, 1
    %p92 = scmp.ne.s32.totalorder %s87, %s89
    %p93 = scmp.eq.s32.totalorder %s11, 0
    %p94 = por %p92, %p93
    %p95 = scmp.ne.s32.totalorder %s87, %s89
    %p96 = scmp.eq.s32.totalorder %s16, 1
    %p97 = por %p95, %p96
    %p98 = scmp.ne.s32.totalorder %s89, %s90
    %p99 = scmp.eq.s32.totalorder %s16, 0
    %p100 = por %p98, %p99
    %p101 = scmp.ne.s32.totalorder %s89, %s90
    %p102 = scmp.eq.s32.totalorder %s17, 1
    %p103 = por %p101, %p102
    %p105 = scmp.ne.s32.totalorder %s90, %s104
    %p106 = scmp.eq.s32.totalorder %s17, 0
    %p107 = por %p105, %p106
    %s109 = sadd.s32 %s108, 1
    %p112 = scmp.eq.s32.totalorder %s11, 1
    %p113 = scmp.ne.s32.totalorder %s108, %s110
    %p114 = scmp.eq.s32.totalorder %s11, 0
    %p115 = por %p113, %p114
    %p116 = scmp.ne.s32.totalorder %s108, %s110
    %p117 = scmp.eq.s32.totalorder %s16, 1
    %p118 = por %p116, %p117
    %p119 = scmp.ne.s32.totalorder %s110, %s111
    %p120 = scmp.eq.s32.totalorder %s16, 0
    %p121 = por %p119, %p120
    %p122 = scmp.ne.s32.totalorder %s110, %s111
    %p123 = scmp.eq.s32.totalorder %s17, 1
    %p124 = por %p122, %p123
    %p126 = scmp.ne.s32.totalorder %s111, %s125
    %p127 = scmp.eq.s32.totalorder %s17, 0
    %p128 = por %p126, %p127
    %s129 = ssub.s32 %s11, %s18
    %p130 = scmp.eq.s32.totalorder %s129, 0
    %s132 = sadd.s32 %s131, 1
    %s133 = scalar_select %p130, %s131, %s132
    %p136 = pneg %p130
    %p137 = scmp.eq.s32.totalorder %s11, 1
    %p138 = por %p136, %p137
    %p139 = scmp.ne.s32.totalorder %s131, %s134
    %p140 = scmp.eq.s32.totalorder %s11, 0
    %p141 = por %p139, %p140
    %p142 = scmp.ne.s32.totalorder %s131, %s134
    %p143 = scmp.eq.s32.totalorder %s16, 1
    %p144 = por %p142, %p143
    %p145 = scmp.ne.s32.totalorder %s134, %s135
    %p146 = scmp.eq.s32.totalorder %s16, 0
    %p147 = por %p145, %p146
    %p148 = scmp.ne.s32.totalorder %s134, %s135
    %p149 = scmp.eq.s32.totalorder %s17, 1
    %p150 = por %p148, %p149
    %p152 = scmp.ne.s32.totalorder %s135, %s151
    %p153 = scmp.eq.s32.totalorder %s17, 0
    %p154 = por %p152, %p153
    %p155 = scmp.le.s32.totalorder 1, %s11
    %p156 = scmp.lt.s32.totalorder %s11, 3
    %p157 = pnand %p155, %p156
    %p158 = pneg %p157
    // Predicated region
    $region9: #{inverted_residual_forward.2} parent=5 // pred_check
      _
    $region10: #{inverted_residual_forward.2} parent=5 // pred_check_branch
      %160 = sbr.rel (%p157) target = $region12
    $region11: #{inverted_residual_forward.2} parent=5 // pred_region
      %s161 = ssub.s32 %s11, 1
      // Predicated region
      $region13: #{inverted_residual_forward.2} parent=11 // pred_check
        %p162 = pneg %p58
      $region14: #{inverted_residual_forward.2} parent=11 // pred_check_branch
        %164 = sbr.rel (%p162) target = $region16
      $region15: #{inverted_residual_forward.2} parent=11 // pred_region
        _
      $region16: #{inverted_residual_forward.2} parent=11 // pred_fallthru
        _
      // Predicated region
      $region17: #{inverted_residual_forward.2} parent=11 // pred_check
        %p165 = pneg %p79
      $region18: #{inverted_residual_forward.2} parent=11 // pred_check_branch
        %167 = sbr.rel (%p165) target = $region20
      $region19: #{inverted_residual_forward.2} parent=11 // pred_region
        _
      $region20: #{inverted_residual_forward.2} parent=11 // pred_fallthru
        _
      // Predicated region
      $region21: #{inverted_residual_forward.2} parent=11 // pred_check
        %p168 = pneg %p100
      $region22: #{inverted_residual_forward.2} parent=11 // pred_check_branch
        %170 = sbr.rel (%p168) target = $region24
      $region23: #{inverted_residual_forward.2} parent=11 // pred_region
        _
      $region24: #{inverted_residual_forward.2} parent=11 // pred_fallthru
        _
      // Predicated region
      $region25: #{inverted_residual_forward.2} parent=11 // pred_check
        %p171 = pneg %p121
      $region26: #{inverted_residual_forward.2} parent=11 // pred_check_branch
        %173 = sbr.rel (%p171) target = $region28
      $region27: #{inverted_residual_forward.2} parent=11 // pred_region
        _
      $region28: #{inverted_residual_forward.2} parent=11 // pred_fallthru
        _
    $region12: #{inverted_residual_forward.2} parent=5 // pred_fallthru
      _
    %p174 = scmp.lt.s32.totalorder %s11, 2
    // Predicated region
    $region29: #{inverted_residual_forward.2} parent=5 // pred_check
      %p175 = pneg %p174
    $region30: #{inverted_residual_forward.2} parent=5 // pred_check_branch
      %177 = sbr.rel (%p175) target = $region32
    $region31: #{inverted_residual_forward.2} parent=5 // pred_region
      // Predicated region
      $region33: #{inverted_residual_forward.2} parent=31 // pred_check
        %p178 = pneg %p31
      $region34: #{inverted_residual_forward.2} parent=31 // pred_check_branch
        %180 = sbr.rel (%p178) target = $region36
      $region35: #{inverted_residual_forward.2} parent=31 // pred_region
        %p181 = scmp.lt.s32.totalorder %s11, 1
        %s182 = scalar_select %p181, %s11, 1
        %s183 = smul.addr %s182, 32
        %s184 = smul.addr %s183, 8
        %s185 = scalar_lea.vmem %s0, %s184
      $region36: #{inverted_residual_forward.2} parent=31 // pred_fallthru
        _
    $region32: #{inverted_residual_forward.2} parent=5 // pred_fallthru
      _
    %p186 = scmp.le.s32.totalorder 1, %s11
    %p187 = scmp.lt.s32.totalorder %s11, 3
    %p188 = pnand %p186, %p187
    %p189 = pneg %p188
    // Predicated region
    $region37: #{inverted_residual_forward.2} parent=5 // pred_check
      _
    $region38: #{inverted_residual_forward.2} parent=5 // pred_check_branch
      %191 = sbr.rel (%p188) target = $region40
    $region39: #{inverted_residual_forward.2} parent=5 // pred_region
      %s192 = ssub.s32 %s11, 1
      %p193 = scmp.lt.s32.totalorder %s16, 1
      %s194 = scalar_select %p193, %s16, 1
      %s195 = smul.addr %s194, 32
      %s196 = smul.addr %s195, 8
      %s197 = scalar_lea.vmem %s0, %s196
      %p198 = pneg %p37
      %p199 = pneg %p34
      %p200 = pneg %p58
      %p201 = pneg %p55
      %p202 = pneg %p79
      %p203 = pneg %p76
      %p204 = pneg %p100
      %p205 = pneg %p97
      %p206 = pneg %p121
      %p207 = pneg %p118
      %p208 = pneg %p147
      %p209 = pneg %p144
      %p210 = scmp.lt.s32.totalorder %s16, 1
      %s211 = scalar_select %p210, %s16, 1
      %s212 = smul.addr %s211, 8
      %s213 = smul.addr %s212, 8
      %s214 = scalar_lea.vmem %s5, %s213
      %p215 = scmp.lt.s32.totalorder %s16, 1
      %s216 = scalar_select %p215, %s16, 1
      %s217 = smul.addr %s216, 32
      %s218 = smul.addr %s217, 8
      %s219 = scalar_lea.vmem %s0, %s218
      %p220 = scmp.lt.s32.totalorder %s16, 1
      %s221 = scalar_select %p220, %s16, 1
      %s222 = smul.addr %s221, 8
      %s223 = smul.addr %s222, 8
      %s224 = scalar_lea.vmem %s5, %s223
      %vm225 = vcmask 31744
      %226 = vst.msk [vmem:[#allocation2] sm:$0xff] %vm225, 0.0
      %227 = vst.msk [vmem:[#allocation2 + $0x8] sm:$0xff] %vm225, 0.0
      %vm228 = vcmask 25600
      %229 = vst.msk [vmem:[#allocation2 + $0x10] sm:$0x3] %vm228, 0.0
      %230 = vst.msk [vmem:[#allocation2 + $0x18] sm:$0xff] %vm225, 0.0
      %231 = vst.msk [vmem:[#allocation2 + $0x20] sm:$0xff] %vm225, 0.0
      %232 = vst.msk [vmem:[#allocation2 + $0x28] sm:$0x3] %vm228, 0.0
      %233 = vst.msk [vmem:[#allocation2 + $0x30] sm:$0xff] %vm225, 0.0
      %234 = vst.msk [vmem:[#allocation2 + $0x38] sm:$0xff] %vm225, 0.0
      %235 = vst.msk [vmem:[#allocation2 + $0x40] sm:$0x3] %vm228, 0.0
      %236 = vst.msk [vmem:[#allocation2 + $0x48] sm:$0xff] %vm225, 0.0
      %237 = vst.msk [vmem:[#allocation2 + $0x50] sm:$0xff] %vm225, 0.0
      %238 = vst.msk [vmem:[#allocation2 + $0x58] sm:$0x3] %vm228, 0.0
      %239 = vst.msk [vmem:[#allocation2 + $0x60] sm:$0xff] %vm225, 0.0
      %240 = vst.msk [vmem:[#allocation2 + $0x68] sm:$0xff] %vm225, 0.0
      %241 = vst.msk [vmem:[#allocation2 + $0x70] sm:$0x3] %vm228, 0.0
      %242 = vst.msk [vmem:[#allocation2 + $0x78] sm:$0xff] %vm225, 0.0
      %243 = vst.msk [vmem:[#allocation2 + $0x80] sm:$0xff] %vm225, 0.0
      %244 = vst.msk [vmem:[#allocation2 + $0x88] sm:$0x3] %vm228, 0.0
      %245 = vst.msk [vmem:[#allocation2 + $0x90] sm:$0xff] %vm225, 0.0
      %246 = vst.msk [vmem:[#allocation2 + $0x98] sm:$0xff] %vm225, 0.0
      %247 = vst.msk [vmem:[#allocation2 + $0xa0] sm:$0x3] %vm228, 0.0
      %248 = vst.msk [vmem:[#allocation2 + $0xa8] sm:$0xff] %vm225, 0.0
      %249 = vst.msk [vmem:[#allocation2 + $0xb0] sm:$0xff] %vm225, 0.0
      %250 = vst.msk [vmem:[#allocation2 + $0xb8] sm:$0x3] %vm228, 0.0
      %251 = vst.msk [vmem:[#allocation2 + $0xc0] sm:$0xff] %vm225, 0.0
      %252 = vst.msk [vmem:[#allocation2 + $0xc8] sm:$0xff] %vm225, 0.0
      %253 = vst.msk [vmem:[#allocation2 + $0xd0] sm:$0x3] %vm228, 0.0
      %254 = vst.msk [vmem:[#allocation2 + $0xd8] sm:$0xff] %vm225, 0.0
      %255 = vst.msk [vmem:[#allocation2 + $0xe0] sm:$0xff] %vm225, 0.0
      %256 = vst.msk [vmem:[#allocation2 + $0xe8] sm:$0x3] %vm228, 0.0
      %257 = vst.msk [vmem:[#allocation2 + $0xf0] sm:$0xff] %vm225, 0.0
      %258 = vst.msk [vmem:[#allocation2 + $0xf8] sm:$0xff] %vm225, 0.0
      %259 = vst.msk [vmem:[#allocation2 + $0x100] sm:$0x3] %vm228, 0.0
      %260 = vst.msk [vmem:[#allocation2 + $0x108] sm:$0xff] %vm225, 0.0
      %261 = vst.msk [vmem:[#allocation2 + $0x110] sm:$0xff] %vm225, 0.0
      %262 = vst.msk [vmem:[#allocation2 + $0x118] sm:$0x3] %vm228, 0.0
      %263 = vst.msk [vmem:[#allocation2 + $0x120] sm:$0xff] %vm225, 0.0
      %264 = vst.msk [vmem:[#allocation2 + $0x128] sm:$0xff] %vm225, 0.0
      %265 = vst.msk [vmem:[#allocation2 + $0x130] sm:$0x3] %vm228, 0.0
      %266 = vst.msk [vmem:[#allocation2 + $0x138] sm:$0xff] %vm225, 0.0
      %267 = vst.msk [vmem:[#allocation2 + $0x140] sm:$0xff] %vm225, 0.0
      %268 = vst.msk [vmem:[#allocation2 + $0x148] sm:$0x3] %vm228, 0.0
      %269 = vst.msk [vmem:[#allocation2 + $0x150] sm:$0xff] %vm225, 0.0
      %270 = vst.msk [vmem:[#allocation2 + $0x158] sm:$0xff] %vm225, 0.0
      %271 = vst.msk [vmem:[#allocation2 + $0x160] sm:$0x3] %vm228, 0.0
      %272 = vst.msk [vmem:[#allocation2 + $0x168] sm:$0xff] %vm225, 0.0
      %273 = vst.msk [vmem:[#allocation2 + $0x170] sm:$0xff] %vm225, 0.0
      %274 = vst.msk [vmem:[#allocation2 + $0x178] sm:$0x3] %vm228, 0.0
      %275 = vst.msk [vmem:[#allocation2 + $0x180] sm:$0xff] %vm225, 0.0
      %276 = vst.msk [vmem:[#allocation2 + $0x188] sm:$0xff] %vm225, 0.0
      %277 = vst.msk [vmem:[#allocation2 + $0x190] sm:$0x3] %vm228, 0.0
      %278 = vst.msk [vmem:[#allocation2 + $0x198] sm:$0xff] %vm225, 0.0
      %279 = vst.msk [vmem:[#allocation2 + $0x1a0] sm:$0xff] %vm225, 0.0
      %280 = vst.msk [vmem:[#allocation2 + $0x1a8] sm:$0x3] %vm228, 0.0
      %v281 = vld [vmem:[%s219] sm:$0xff]
      %v282 = vld [vmem:[%s219 + $0x8] sm:$0xff]
      %v283 = vld [vmem:[%s219 + $0x10] sm:$0xff]
      %v284 = vld [vmem:[%s219 + $0x18] sm:$0xff]
      %v285 = vld [vmem:[%s219 + $0x20] sm:$0xff]
      %v286 = vld [vmem:[%s219 + $0x28] sm:$0xff]
      %v287 = vld [vmem:[%s219 + $0x30] sm:$0xff]
      %v288 = vld [vmem:[%s219 + $0x38] sm:$0xff]
      %v289 = vld [vmem:[%s219 + $0x40] sm:$0xff]
      %v290 = vld [vmem:[%s219 + $0x48] sm:$0xff]
      %v291 = vld [vmem:[%s219 + $0x50] sm:$0xff]
      %v292 = vld [vmem:[%s219 + $0x58] sm:$0xff]
      %v293 = vld [vmem:[%s219 + $0x60] sm:$0xff]
      %v294 = vld [vmem:[%s219 + $0x68] sm:$0xff]
      %v295 = vld [vmem:[%s219 + $0x70] sm:$0xff]
      %v296 = vld [vmem:[%s219 + $0x78] sm:$0xff]
      %v297 = vld [vmem:[%s219 + $0x80] sm:$0xff]
      %v298 = vld [vmem:[%s219 + $0x88] sm:$0xff]
      %v299 = vld [vmem:[%s219 + $0x90] sm:$0xff]
      %v300 = vld [vmem:[%s219 + $0x98] sm:$0xff]
      %v301 = vld [vmem:[%s219 + $0xa0] sm:$0xff]
      %v302 = vld [vmem:[%s219 + $0xa8] sm:$0xff]
      %v303 = vld [vmem:[%s219 + $0xb0] sm:$0xff]
      %v304 = vld [vmem:[%s219 + $0xb8] sm:$0xff]
      %v305 = vld [vmem:[%s219 + $0xc0] sm:$0xff]
      %v306 = vld [vmem:[%s219 + $0xc8] sm:$0xff]
      %v307 = vld [vmem:[%s219 + $0xd0] sm:$0xff]
      %v308 = vld [vmem:[%s219 + $0xd8] sm:$0xff]
      %v309 = vld [vmem:[%s219 + $0xe0] sm:$0xff]
      %v310 = vld [vmem:[%s219 + $0xe8] sm:$0xff]
      %v311 = vld [vmem:[%s219 + $0xf0] sm:$0xff]
      %v312 = vld [vmem:[%s219 + $0xf8] sm:$0xff]
      %s313 = scalar_lea.vmem [#allocation2], 24
      %314 = vst.msk [vmem:[%s313 + $0x1] sm:$0xff] %vm225, %v281
      %315 = vst.msk [vmem:[%s313 + $0x9] sm:$0xff] %vm225, %v282
      %316 = vst.msk [vmem:[%s313 + $0x19] sm:$0xff] %vm225, %v283
      %317 = vst.msk [vmem:[%s313 + $0x21] sm:$0xff] %vm225, %v284
      %318 = vst.msk [vmem:[%s313 + $0x31] sm:$0xff] %vm225, %v285
      %319 = vst.msk [vmem:[%s313 + $0x39] sm:$0xff] %vm225, %v286
      %320 = vst.msk [vmem:[%s313 + $0x49] sm:$0xff] %vm225, %v287
      %321 = vst.msk [vmem:[%s313 + $0x51] sm:$0xff] %vm225, %v288
      %322 = vst.msk [vmem:[%s313 + $0x61] sm:$0xff] %vm225, %v289
      %323 = vst.msk [vmem:[%s313 + $0x69] sm:$0xff] %vm225, %v290
      %324 = vst.msk [vmem:[%s313 + $0x79] sm:$0xff] %vm225, %v291
      %325 = vst.msk [vmem:[%s313 + $0x81] sm:$0xff] %vm225, %v292
      %326 = vst.msk [vmem:[%s313 + $0x91] sm:$0xff] %vm225, %v293
      %327 = vst.msk [vmem:[%s313 + $0x99] sm:$0xff] %vm225, %v294
      %328 = vst.msk [vmem:[%s313 + $0xa9] sm:$0xff] %vm225, %v295
      %329 = vst.msk [vmem:[%s313 + $0xb1] sm:$0xff] %vm225, %v296
      %330 = vst.msk [vmem:[%s313 + $0xc1] sm:$0xff] %vm225, %v297
      %331 = vst.msk [vmem:[%s313 + $0xc9] sm:$0xff] %vm225, %v298
      %332 = vst.msk [vmem:[%s313 + $0xd9] sm:$0xff] %vm225, %v299
      %333 = vst.msk [vmem:[%s313 + $0xe1] sm:$0xff] %vm225, %v300
      %334 = vst.msk [vmem:[%s313 + $0xf1] sm:$0xff] %vm225, %v301
      %335 = vst.msk [vmem:[%s313 + $0xf9] sm:$0xff] %vm225, %v302
      %336 = vst.msk [vmem:[%s313 + $0x109] sm:$0xff] %vm225, %v303
      %337 = vst.msk [vmem:[%s313 + $0x111] sm:$0xff] %vm225, %v304
      %338 = vst.msk [vmem:[%s313 + $0x121] sm:$0xff] %vm225, %v305
      %339 = vst.msk [vmem:[%s313 + $0x129] sm:$0xff] %vm225, %v306
      %340 = vst.msk [vmem:[%s313 + $0x139] sm:$0xff] %vm225, %v307
      %341 = vst.msk [vmem:[%s313 + $0x141] sm:$0xff] %vm225, %v308
      %342 = vst.msk [vmem:[%s313 + $0x151] sm:$0xff] %vm225, %v309
      %343 = vst.msk [vmem:[%s313 + $0x159] sm:$0xff] %vm225, %v310
      %344 = vst.msk [vmem:[%s313 + $0x169] sm:$0xff] %vm225, %v311
      %345 = vst.msk [vmem:[%s313 + $0x171] sm:$0xff] %vm225, %v312
      %v346 = vld [vmem:[#allocation2] ss:$2 sm:$0xff]
      %s347 = scalar_lea.vmem [#allocation2], 48
      %v348 = vld [vmem:[%s347] ss:$2 sm:$0xff]
      %s349 = scalar_lea.vmem [#allocation2], 96
      %v350 = vld [vmem:[%s349] ss:$2 sm:$0xff]
      %s351 = scalar_lea.vmem [#allocation2], 144
      %v352 = vld [vmem:[%s351] ss:$2 sm:$0xff]
      %s353 = scalar_lea.vmem [#allocation2], 192
      %v354 = vld [vmem:[%s353] ss:$2 sm:$0xff]
      %s355 = scalar_lea.vmem [#allocation2], 240
      %v356 = vld [vmem:[%s355] ss:$2 sm:$0xff]
      %s357 = scalar_lea.vmem [#allocation2], 288
      %v358 = vld [vmem:[%s357] ss:$2 sm:$0xff]
      %s359 = scalar_lea.vmem [#allocation2], 336
      %v360 = vld [vmem:[%s359] ss:$2 sm:$0xff]
      %v361 = vld [vmem:[%s1] sm:$0x1]
      %v362 = vlaneseq
      %v363 = vshrl.u32 %v362, 7
      %v364 = vsub.s32 0, %v363
      %v365 = vrot.slane %v361, %v364
      %v366 = vmul.f32 %v346, %v365
      %v367 = vmul.f32 %v348, %v365
      %v368 = vmul.f32 %v350, %v365
      %v369 = vmul.f32 %v352, %v365
      %v370 = vmul.f32 %v354, %v365
      %v371 = vmul.f32 %v356, %v365
      %v372 = vmul.f32 %v358, %v365
      %v373 = vmul.f32 %v360, %v365
      %v374 = vadd.f32 %v366, 0.0
      %v375 = vadd.f32 %v367, 0.0
      %v376 = vadd.f32 %v368, 0.0
      %v377 = vadd.f32 %v369, 0.0
      %v378 = vadd.f32 %v370, 0.0
      %v379 = vadd.f32 %v371, 0.0
      %v380 = vadd.f32 %v372, 0.0
      %v381 = vadd.f32 %v373, 0.0
      %s382 = scalar_lea.vmem [#allocation2], 1
      %v383 = vld [vmem:[%s382] ss:$2 sm:$0xff]
      %s384 = scalar_lea.vmem [#allocation2], 49
      %v385 = vld [vmem:[%s384] ss:$2 sm:$0xff]
      %s386 = scalar_lea.vmem [#allocation2], 97
      %v387 = vld [vmem:[%s386] ss:$2 sm:$0xff]
      %s388 = scalar_lea.vmem [#allocation2], 145
      %v389 = vld [vmem:[%s388] ss:$2 sm:$0xff]
      %s390 = scalar_lea.vmem [#allocation2], 193
      %v391 = vld [vmem:[%s390] ss:$2 sm:$0xff]
      %s392 = scalar_lea.vmem [#allocation2], 241
      %v393 = vld [vmem:[%s392] ss:$2 sm:$0xff]
      %s394 = scalar_lea.vmem [#allocation2], 289
      %v395 = vld [vmem:[%s394] ss:$2 sm:$0xff]
      %s396 = scalar_lea.vmem [#allocation2], 337
      %v397 = vld [vmem:[%s396] ss:$2 sm:$0xff]
      %v398 = vld [vmem:[%s1 + $0x1] sm:$0x1]
      %v399 = vlaneseq
      %v400 = vshrl.u32 %v399, 7
      %v401 = vsub.s32 0, %v400
      %v402 = vrot.slane %v398, %v401
      %v403 = vmul.f32 %v383, %v402
      %v404 = vmul.f32 %v385, %v402
      %v405 = vmul.f32 %v387, %v402
      %v406 = vmul.f32 %v389, %v402
      %v407 = vmul.f32 %v391, %v402
      %v408 = vmul.f32 %v393, %v402
      %v409 = vmul.f32 %v395, %v402
      %v410 = vmul.f32 %v397, %v402
      %v411 = vadd.f32 %v374, %v403
      %v412 = vadd.f32 %v375, %v404
      %v413 = vadd.f32 %v376, %v405
      %v414 = vadd.f32 %v377, %v406
      %v415 = vadd.f32 %v378, %v407
      %v416 = vadd.f32 %v379, %v408
      %v417 = vadd.f32 %v380, %v409
      %v418 = vadd.f32 %v381, %v410
      %s419 = scalar_lea.vmem [#allocation2], 2
      %v420 = vld [vmem:[%s419] ss:$2 sm:$0xff]
      %s421 = scalar_lea.vmem [#allocation2], 50
      %v422 = vld [vmem:[%s421] ss:$2 sm:$0xff]
      %s423 = scalar_lea.vmem [#allocation2], 98
      %v424 = vld [vmem:[%s423] ss:$2 sm:$0xff]
      %s425 = scalar_lea.vmem [#allocation2], 146
      %v426 = vld [vmem:[%s425] ss:$2 sm:$0xff]
      %s427 = scalar_lea.vmem [#allocation2], 194
      %v428 = vld [vmem:[%s427] ss:$2 sm:$0xff]
      %s429 = scalar_lea.vmem [#allocation2], 242
      %v430 = vld [vmem:[%s429] ss:$2 sm:$0xff]
      %s431 = scalar_lea.vmem [#allocation2], 290
      %v432 = vld [vmem:[%s431] ss:$2 sm:$0xff]
      %s433 = scalar_lea.vmem [#allocation2], 338
      %v434 = vld [vmem:[%s433] ss:$2 sm:$0xff]
      %v435 = vld [vmem:[%s1 + $0x2] sm:$0x1]
      %v436 = vlaneseq
      %v437 = vshrl.u32 %v436, 7
      %v438 = vsub.s32 0, %v437
      %v439 = vrot.slane %v435, %v438
      %v440 = vmul.f32 %v420, %v439
      %v441 = vmul.f32 %v422, %v439
      %v442 = vmul.f32 %v424, %v439
      %v443 = vmul.f32 %v426, %v439
      %v444 = vmul.f32 %v428, %v439
      %v445 = vmul.f32 %v430, %v439
      %v446 = vmul.f32 %v432, %v439
      %v447 = vmul.f32 %v434, %v439
      %v448 = vadd.f32 %v411, %v440
      %v449 = vadd.f32 %v412, %v441
      %v450 = vadd.f32 %v413, %v442
      %v451 = vadd.f32 %v414, %v443
      %v452 = vadd.f32 %v415, %v444
      %v453 = vadd.f32 %v416, %v445
      %v454 = vadd.f32 %v417, %v446
      %v455 = vadd.f32 %v418, %v447
      %v456 = vld [vmem:[%s313] ss:$2 sm:$0xff]
      %s457 = scalar_lea.vmem %s313, 48 [#allocation2]
      %v458 = vld [vmem:[%s457] ss:$2 sm:$0xff]
      %s459 = scalar_lea.vmem %s313, 96 [#allocation2]
      %v460 = vld [vmem:[%s459] ss:$2 sm:$0xff]
      %s461 = scalar_lea.vmem %s313, 144 [#allocation2]
      %v462 = vld [vmem:[%s461] ss:$2 sm:$0xff]
      %s463 = scalar_lea.vmem %s313, 192 [#allocation2]
      %v464 = vld [vmem:[%s463] ss:$2 sm:$0xff]
      %s465 = scalar_lea.vmem %s313, 240 [#allocation2]
      %v466 = vld [vmem:[%s465] ss:$2 sm:$0xff]
      %s467 = scalar_lea.vmem %s313, 288 [#allocation2]
      %v468 = vld [vmem:[%s467] ss:$2 sm:$0xff]
      %s469 = scalar_lea.vmem %s313, 336 [#allocation2]
      %v470 = vld [vmem:[%s469] ss:$2 sm:$0xff]
      %v471 = vld [vmem:[%s1 + $0x3] sm:$0x1]
      %v472 = vlaneseq
      %v473 = vshrl.u32 %v472, 7
      %v474 = vsub.s32 0, %v473
      %v475 = vrot.slane %v471, %v474
      %v476 = vmul.f32 %v456, %v475
      %v477 = vmul.f32 %v458, %v475
      %v478 = vmul.f32 %v460, %v475
      %v479 = vmul.f32 %v462, %v475
      %v480 = vmul.f32 %v464, %v475
      %v481 = vmul.f32 %v466, %v475
      %v482 = vmul.f32 %v468, %v475
      %v483 = vmul.f32 %v470, %v475
      %v484 = vadd.f32 %v448, %v476
      %v485 = vadd.f32 %v449, %v477
      %v486 = vadd.f32 %v450, %v478
      %v487 = vadd.f32 %v451, %v479
      %v488 = vadd.f32 %v452, %v480
      %v489 = vadd.f32 %v453, %v481
      %v490 = vadd.f32 %v454, %v482
      %v491 = vadd.f32 %v455, %v483
      %s492 = scalar_lea.vmem %s313, 1 [#allocation2]
      %v493 = vld [vmem:[%s492] ss:$2 sm:$0xff]
      %s494 = scalar_lea.vmem %s313, 49 [#allocation2]
      %v495 = vld [vmem:[%s494] ss:$2 sm:$0xff]
      %s496 = scalar_lea.vmem %s313, 97 [#allocation2]
      %v497 = vld [vmem:[%s496] ss:$2 sm:$0xff]
      %s498 = scalar_lea.vmem %s313, 145 [#allocation2]
      %v499 = vld [vmem:[%s498] ss:$2 sm:$0xff]
      %s500 = scalar_lea.vmem %s313, 193 [#allocation2]
      %v501 = vld [vmem:[%s500] ss:$2 sm:$0xff]
      %s502 = scalar_lea.vmem %s313, 241 [#allocation2]
      %v503 = vld [vmem:[%s502] ss:$2 sm:$0xff]
      %s504 = scalar_lea.vmem %s313, 289 [#allocation2]
      %v505 = vld [vmem:[%s504] ss:$2 sm:$0xff]
      %s506 = scalar_lea.vmem %s313, 337 [#allocation2]
      %v507 = vld [vmem:[%s506] ss:$2 sm:$0xff]
      %v508 = vld [vmem:[%s1 + $0x4] sm:$0x1]
      %v509 = vlaneseq
      %v510 = vshrl.u32 %v509, 7
      %v511 = vsub.s32 0, %v510
      %v512 = vrot.slane %v508, %v511
      %v513 = vmul.f32 %v493, %v512
      %v514 = vmul.f32 %v495, %v512
      %v515 = vmul.f32 %v497, %v512
      %v516 = vmul.f32 %v499, %v512
      %v517 = vmul.f32 %v501, %v512
      %v518 = vmul.f32 %v503, %v512
      %v519 = vmul.f32 %v505, %v512
      %v520 = vmul.f32 %v507, %v512
      %v521 = vadd.f32 %v484, %v513
      %v522 = vadd.f32 %v485, %v514
      %v523 = vadd.f32 %v486, %v515
      %v524 = vadd.f32 %v487, %v516
      %v525 = vadd.f32 %v488, %v517
      %v526 = vadd.f32 %v489, %v518
      %v527 = vadd.f32 %v490, %v519
      %v528 = vadd.f32 %v491, %v520
      %s529 = scalar_lea.vmem %s313, 2 [#allocation2]
      %v530 = vld [vmem:[%s529] ss:$2 sm:$0xff]
      %s531 = scalar_lea.vmem %s313, 50 [#allocation2]
      %v532 = vld [vmem:[%s531] ss:$2 sm:$0xff]
      %s533 = scalar_lea.vmem %s313, 98 [#allocation2]
      %v534 = vld [vmem:[%s533] ss:$2 sm:$0xff]
      %s535 = scalar_lea.vmem %s313, 146 [#allocation2]
      %v536 = vld [vmem:[%s535] ss:$2 sm:$0xff]
      %s537 = scalar_lea.vmem %s313, 194 [#allocation2]
      %v538 = vld [vmem:[%s537] ss:$2 sm:$0xff]
      %s539 = scalar_lea.vmem %s313, 242 [#allocation2]
      %v540 = vld [vmem:[%s539] ss:$2 sm:$0xff]
      %s541 = scalar_lea.vmem %s313, 290 [#allocation2]
      %v542 = vld [vmem:[%s541] ss:$2 sm:$0xff]
      %s543 = scalar_lea.vmem %s313, 338 [#allocation2]
      %v544 = vld [vmem:[%s543] ss:$2 sm:$0xff]
      %v545 = vld [vmem:[%s1 + $0x5] sm:$0x1]
      %v546 = vlaneseq
      %v547 = vshrl.u32 %v546, 7
      %v548 = vsub.s32 0, %v547
      %v549 = vrot.slane %v545, %v548
      %v550 = vmul.f32 %v530, %v549
      %v551 = vmul.f32 %v532, %v549
      %v552 = vmul.f32 %v534, %v549
      %v553 = vmul.f32 %v536, %v549
      %v554 = vmul.f32 %v538, %v549
      %v555 = vmul.f32 %v540, %v549
      %v556 = vmul.f32 %v542, %v549
      %v557 = vmul.f32 %v544, %v549
      %v558 = vadd.f32 %v521, %v550
      %v559 = vadd.f32 %v522, %v551
      %v560 = vadd.f32 %v523, %v552
      %v561 = vadd.f32 %v524, %v553
      %v562 = vadd.f32 %v525, %v554
      %v563 = vadd.f32 %v526, %v555
      %v564 = vadd.f32 %v527, %v556
      %v565 = vadd.f32 %v528, %v557
      %s566 = scalar_lea.vmem [#allocation2], 48
      %v567 = vld [vmem:[%s566] ss:$2 sm:$0xff]
      %s568 = scalar_lea.vmem %s566, 48 [#allocation2]
      %v569 = vld [vmem:[%s568] ss:$2 sm:$0xff]
      %s570 = scalar_lea.vmem %s566, 96 [#allocation2]
      %v571 = vld [vmem:[%s570] ss:$2 sm:$0xff]
      %s572 = scalar_lea.vmem %s566, 144 [#allocation2]
      %v573 = vld [vmem:[%s572] ss:$2 sm:$0xff]
      %s574 = scalar_lea.vmem %s566, 192 [#allocation2]
      %v575 = vld [vmem:[%s574] ss:$2 sm:$0xff]
      %s576 = scalar_lea.vmem %s566, 240 [#allocation2]
      %v577 = vld [vmem:[%s576] ss:$2 sm:$0xff]
      %s578 = scalar_lea.vmem %s566, 288 [#allocation2]
      %v579 = vld [vmem:[%s578] ss:$2 sm:$0xff]
      %s580 = scalar_lea.vmem %s566, 336 [#allocation2]
      %v581 = vld [vmem:[%s580] ss:$2 sm:$0xff]
      %v582 = vld [vmem:[%s1 + $0x6] sm:$0x1]
      %v583 = vlaneseq
      %v584 = vshrl.u32 %v583, 7
      %v585 = vsub.s32 0, %v584
      %v586 = vrot.slane %v582, %v585
      %v587 = vmul.f32 %v567, %v586
      %v588 = vmul.f32 %v569, %v586
      %v589 = vmul.f32 %v571, %v586
      %v590 = vmul.f32 %v573, %v586
      %v591 = vmul.f32 %v575, %v586
      %v592 = vmul.f32 %v577, %v586
      %v593 = vmul.f32 %v579, %v586
      %v594 = vmul.f32 %v581, %v586
      %v595 = vadd.f32 %v558, %v587
      %v596 = vadd.f32 %v559, %v588
      %v597 = vadd.f32 %v560, %v589
      %v598 = vadd.f32 %v561, %v590
      %v599 = vadd.f32 %v562, %v591
      %v600 = vadd.f32 %v563, %v592
      %v601 = vadd.f32 %v564, %v593
      %v602 = vadd.f32 %v565, %v594
      %s603 = scalar_lea.vmem %s566, 1 [#allocation2]
      %v604 = vld [vmem:[%s603] ss:$2 sm:$0xff]
      %s605 = scalar_lea.vmem %s566, 49 [#allocation2]
      %v606 = vld [vmem:[%s605] ss:$2 sm:$0xff]
      %s607 = scalar_lea.vmem %s566, 97 [#allocation2]
      %v608 = vld [vmem:[%s607] ss:$2 sm:$0xff]
      %s609 = scalar_lea.vmem %s566, 145 [#allocation2]
      %v610 = vld [vmem:[%s609] ss:$2 sm:$0xff]
      %s611 = scalar_lea.vmem %s566, 193 [#allocation2]
      %v612 = vld [vmem:[%s611] ss:$2 sm:$0xff]
      %s613 = scalar_lea.vmem %s566, 241 [#allocation2]
      %v614 = vld [vmem:[%s613] ss:$2 sm:$0xff]
      %s615 = scalar_lea.vmem %s566, 289 [#allocation2]
      %v616 = vld [vmem:[%s615] ss:$2 sm:$0xff]
      %s617 = scalar_lea.vmem %s566, 337 [#allocation2]
      %v618 = vld [vmem:[%s617] ss:$2 sm:$0xff]
      %v619 = vld [vmem:[%s1 + $0x7] sm:$0x1]
      %v620 = vlaneseq
      %v621 = vshrl.u32 %v620, 7
      %v622 = vsub.s32 0, %v621
      %v623 = vrot.slane %v619, %v622
      %v624 = vmul.f32 %v604, %v623
      %v625 = vmul.f32 %v606, %v623
      %v626 = vmul.f32 %v608, %v623
      %v627 = vmul.f32 %v610, %v623
      %v628 = vmul.f32 %v612, %v623
      %v629 = vmul.f32 %v614, %v623
      %v630 = vmul.f32 %v616, %v623
      %v631 = vmul.f32 %v618, %v623
      %v632 = vadd.f32 %v595, %v624
      %v633 = vadd.f32 %v596, %v625
      %v634 = vadd.f32 %v597, %v626
      %v635 = vadd.f32 %v598, %v627
      %v636 = vadd.f32 %v599, %v628
      %v637 = vadd.f32 %v600, %v629
      %v638 = vadd.f32 %v601, %v630
      %v639 = vadd.f32 %v602, %v631
      %s640 = scalar_lea.vmem %s566, 2 [#allocation2]
      %v641 = vld [vmem:[%s640] ss:$2 sm:$0xff]
      %s642 = scalar_lea.vmem %s566, 50 [#allocation2]
      %v643 = vld [vmem:[%s642] ss:$2 sm:$0xff]
      %s644 = scalar_lea.vmem %s566, 98 [#allocation2]
      %v645 = vld [vmem:[%s644] ss:$2 sm:$0xff]
      %s646 = scalar_lea.vmem %s566, 146 [#allocation2]
      %v647 = vld [vmem:[%s646] ss:$2 sm:$0xff]
      %s648 = scalar_lea.vmem %s566, 194 [#allocation2]
      %v649 = vld [vmem:[%s648] ss:$2 sm:$0xff]
      %s650 = scalar_lea.vmem %s566, 242 [#allocation2]
      %v651 = vld [vmem:[%s650] ss:$2 sm:$0xff]
      %s652 = scalar_lea.vmem %s566, 290 [#allocation2]
      %v653 = vld [vmem:[%s652] ss:$2 sm:$0xff]
      %s654 = scalar_lea.vmem %s566, 338 [#allocation2]
      %v655 = vld [vmem:[%s654] ss:$2 sm:$0xff]
      %v656 = vld [vmem:[%s1 + $0x8] sm:$0x1]
      %v657 = vlaneseq
      %v658 = vshrl.u32 %v657, 7
      %v659 = vsub.s32 0, %v658
      %v660 = vrot.slane %v656, %v659
      %v661 = vmul.f32 %v641, %v660
      %v662 = vmul.f32 %v643, %v660
      %v663 = vmul.f32 %v645, %v660
      %v664 = vmul.f32 %v647, %v660
      %v665 = vmul.f32 %v649, %v660
      %v666 = vmul.f32 %v651, %v660
      %v667 = vmul.f32 %v653, %v660
      %v668 = vmul.f32 %v655, %v660
      %v669 = vadd.f32 %v632, %v661
      %v670 = vadd.f32 %v633, %v662
      %v671 = vadd.f32 %v634, %v663
      %v672 = vadd.f32 %v635, %v664
      %v673 = vadd.f32 %v636, %v665
      %v674 = vadd.f32 %v637, %v666
      %v675 = vadd.f32 %v638, %v667
      %v676 = vadd.f32 %v639, %v668
      %v677 = vld [vmem:[%s2] sm:$0x1]
      %v679 = vlaneseq
      %v680 = vshrl.u32 %v679, 7
      %v681 = vsub.s32 0, %v680
      %v682 = vrot.slane %v677, %v681
      %v684 = vadd.f32 %v669, %v682
      %v685 = vadd.f32 %v670, %v682
      %v686 = vadd.f32 %v671, %v682
      %v687 = vadd.f32 %v672, %v682
      %v688 = vadd.f32 %v673, %v682
      %v689 = vadd.f32 %v674, %v682
      %v690 = vadd.f32 %v675, %v682
      %v691 = vadd.f32 %v676, %v682
      %v692 = vld [vmem:[%s3] sm:$0xf]
      %v693 = vld [vmem:[%s4] sm:$0x1]
      %v695 = vlaneseq
      %v696 = vshrl.u32 %v695, 7
      %v697 = vsub.s32 0, %v696
      %v698 = vrot.slane %v693, %v697
      %v701 = vsel %vm225, %v684, 0
      %v704 = vsel %vm225, %v685, 0
      %v707 = vsel %vm225, %v686, 0
      %v710 = vsel %vm225, %v687, 0
      %v713 = vsel %vm225, %v688, 0
      %v716 = vsel %vm225, %v689, 0
      %v719 = vsel %vm225, %v690, 0
      %v722 = vsel %vm225, %v691, 0
      %vm724 = vcmask 1043456
      %v726 = vsel %vm724, %v692, 0
      %728 = vmatprep.subr.mxu0 0.0
      %729 = vmatpush1.msra.mxu0 %v726
      %730 = vmatprep.subr.mxu0 0.0
      %731 = vmatpush1.msra.mxu0 0.0
      %732 = vmatprep.subr.mxu0 0.0
      %733 = vmatpush1.msra.mxu0 0.0
      %734 = vmatprep.subr.mxu0 0.0
      %735 = vmatpush1.msra.mxu0 0.0
      %736 = vmatprep.subr.mxu0 0.0
      %737 = vmatpush1.msra.mxu0 0.0
      %738 = vmatprep.subr.mxu0 0.0
      %739 = vmatpush1.msra.mxu0 0.0
      %740 = vmatprep.subr.mxu0 0.0
      %741 = vmatpush1.msra.mxu0 0.0
      %742 = vmatprep.subr.mxu0 0.0
      %743 = vmatpush1.msra.mxu0 0.0
      %744 = vmatprep.subr.mxu0 0.0
      %745 = vmatpush1.msra.mxu0 0.0
      %746 = vmatprep.subr.mxu0 0.0
      %747 = vmatpush1.msra.mxu0 0.0
      %748 = vmatprep.subr.mxu0 0.0
      %749 = vmatpush1.msra.mxu0 0.0
      %750 = vmatprep.subr.mxu0 0.0
      %751 = vmatpush1.msra.mxu0 0.0
      %752 = vmatprep.subr.mxu0 0.0
      %753 = vmatpush1.msra.mxu0 0.0
      %754 = vmatprep.subr.mxu0 0.0
      %755 = vmatpush1.msra.mxu0 0.0
      %756 = vmatprep.subr.mxu0 0.0
      %757 = vmatpush1.msra.mxu0 0.0
      %758 = vmatprep.subr.mxu0 0.0
      %759 = vmatpush1.msra.mxu0 0.0
      %760 = vmatprep.subr.mxu0 0.0
      %761 = vmatpush1.msra.mxu0 0.0
      %762 = vmatprep.subr.mxu0 0.0
      %763 = vmatpush1.msra.mxu0 0.0
      %764 = vmatprep.subr.mxu0 0.0
      %765 = vmatpush1.msra.mxu0 0.0
      %766 = vmatprep.subr.mxu0 0.0
      %767 = vmatpush1.msra.mxu0 0.0
      %768 = vmatprep.subr.mxu0 0.0
      %769 = vmatpush1.msra.mxu0 0.0
      %770 = vmatprep.subr.mxu0 0.0
      %771 = vmatpush1.msra.mxu0 0.0
      %772 = vmatprep.subr.mxu0 0.0
      %773 = vmatpush1.msra.mxu0 0.0
      %774 = vmatprep.subr.mxu0 0.0
      %775 = vmatpush1.msra.mxu0 0.0
      %776 = vmatprep.subr.mxu0 0.0
      %777 = vmatpush1.msra.mxu0 0.0
      %778 = vmatprep.subr.mxu0 0.0
      %779 = vmatpush1.msra.mxu0 0.0
      %780 = vmatprep.subr.mxu0 0.0
      %781 = vmatpush1.msra.mxu0 0.0
      %782 = vmatprep.subr.mxu0 0.0
      %783 = vmatpush1.msra.mxu0 0.0
      %784 = vmatprep.subr.mxu0 0.0
      %785 = vmatpush1.msra.mxu0 0.0
      %786 = vmatprep.subr.mxu0 0.0
      %787 = vmatpush1.msra.mxu0 0.0
      %788 = vmatprep.subr.mxu0 0.0
      %789 = vmatpush1.msra.mxu0 0.0
      %790 = vmatprep.subr.mxu0 0.0
      %791 = vmatpush1.msra.mxu0 0.0
      %792 = vmatprep.mubr.f32.mxu0 0.0
      %793 = vmatmul.mubr.f32.gmra.mrb[0].mxu0 %v701
      %v794 = vpop.f32.mrb[0].mxu0
      %v795 = vadd.f32 %v698, %v794
      %v796 = vpop.f32.mrb[0].mxu0
      %797 = vmatprep.mubr.f32.mxu0 0.0
      %798 = vmatmul.mubr.f32.gmra.mrb[0].mxu0 %v704
      %v799 = vpop.f32.mrb[0].mxu0
      %v800 = vadd.f32 %v698, %v799
      %v801 = vpop.f32.mrb[0].mxu0
      %802 = vmatprep.mubr.f32.mxu0 0.0
      %803 = vmatmul.mubr.f32.gmra.mrb[0].mxu0 %v707
      %v804 = vpop.f32.mrb[0].mxu0
      %v805 = vadd.f32 %v698, %v804
      %v806 = vpop.f32.mrb[0].mxu0
      %807 = vmatprep.mubr.f32.mxu0 0.0
      %808 = vmatmul.mubr.f32.gmra.mrb[0].mxu0 %v710
      %v809 = vpop.f32.mrb[0].mxu0
      %v810 = vadd.f32 %v698, %v809
      %v811 = vpop.f32.mrb[0].mxu0
      %812 = vmatprep.mubr.f32.mxu0 0.0
      %813 = vmatmul.mubr.f32.gmra.mrb[0].mxu0 %v713
      %v814 = vpop.f32.mrb[0].mxu0
      %v815 = vadd.f32 %v698, %v814
      %v816 = vpop.f32.mrb[0].mxu0
      %817 = vmatprep.mubr.f32.mxu0 0.0
      %818 = vmatmul.mubr.f32.gmra.mrb[0].mxu0 %v716
      %v819 = vpop.f32.mrb[0].mxu0
      %v820 = vadd.f32 %v698, %v819
      %v821 = vpop.f32.mrb[0].mxu0
      %822 = vmatprep.mubr.f32.mxu0 0.0
      %823 = vmatmul.mubr.f32.gmra.mrb[0].mxu0 %v719
      %v824 = vpop.f32.mrb[0].mxu0
      %v825 = vadd.f32 %v698, %v824
      %v826 = vpop.f32.mrb[0].mxu0
      %827 = vmatprep.mubr.f32.mxu0 0.0
      %828 = vmatmul.mubr.f32.gmra.mrb[0].mxu0 %v722
      %v829 = vpop.f32.mrb[0].mxu0
      %v830 = vadd.f32 %v698, %v829
      %v831 = vpop.f32.mrb[0].mxu0
      %832 = vdwg.mxu0
      %v833 = vmax.f32 %v795, 0.0
      %v834 = vmax.f32 %v800, 0.0
      %v835 = vmax.f32 %v805, 0.0
      %v836 = vmax.f32 %v810, 0.0
      %v837 = vmax.f32 %v815, 0.0
      %v838 = vmax.f32 %v820, 0.0
      %v839 = vmax.f32 %v825, 0.0
      %v840 = vmax.f32 %v830, 0.0
      %vm841 = vcmask 64512
      %842 = vst.msk [vmem:[%s224] sm:$0xff] %vm841, %v833
      %843 = vst.msk [vmem:[%s224 + $0x8] sm:$0xff] %vm841, %v834
      %844 = vst.msk [vmem:[%s224 + $0x10] sm:$0xff] %vm841, %v835
      %845 = vst.msk [vmem:[%s224 + $0x18] sm:$0xff] %vm841, %v836
      %846 = vst.msk [vmem:[%s224 + $0x20] sm:$0xff] %vm841, %v837
      %847 = vst.msk [vmem:[%s224 + $0x28] sm:$0xff] %vm841, %v838
      %848 = vst.msk [vmem:[%s224 + $0x30] sm:$0xff] %vm841, %v839
      %849 = vst.msk [vmem:[%s224 + $0x38] sm:$0xff] %vm841, %v840
      %p850 = scmp.lt.s32.totalorder %s16, 1
      %s851 = scalar_select %p850, %s16, 1
      %s852 = smul.addr %s851, 8
      %s853 = smul.addr %s852, 8
      %s854 = scalar_lea.vmem %s5, %s853
      // Predicated region
      $region41: #{inverted_residual_forward.2} parent=39 // pred_check
        %p855 = pneg %p144
      $region42: #{inverted_residual_forward.2} parent=39 // pred_check_branch
        %857 = sbr.rel (%p855) target = $region44
      $region43: #{inverted_residual_forward.2} parent=39 // pred_region
        _
      $region44: #{inverted_residual_forward.2} parent=39 // pred_fallthru
        _
    $region40: #{inverted_residual_forward.2} parent=5 // pred_fallthru
      _
    %p858 = scmp.le.s32.totalorder 2, %s11
    // Predicated region
    $region45: #{inverted_residual_forward.2} parent=5 // pred_check
      %p859 = pneg %p858
    $region46: #{inverted_residual_forward.2} parent=5 // pred_check_branch
      %861 = sbr.rel (%p859) target = $region48
    $region47: #{inverted_residual_forward.2} parent=5 // pred_region
      %s862 = ssub.s32 %s11, 2
      // Predicated region
      $region49: #{inverted_residual_forward.2} parent=47 // pred_check
        %p863 = pneg %p150
      $region50: #{inverted_residual_forward.2} parent=47 // pred_check_branch
        %865 = sbr.rel (%p863) target = $region52
      $region51: #{inverted_residual_forward.2} parent=47 // pred_region
        %p866 = scmp.lt.s32.totalorder %s17, 1
        %s867 = scalar_select %p866, %s17, 1
        %s868 = smul.addr %s867, 8
        %s869 = smul.addr %s868, 8
        %s870 = scalar_lea.vmem %s5, %s869
      $region52: #{inverted_residual_forward.2} parent=47 // pred_fallthru
        _
    $region48: #{inverted_residual_forward.2} parent=5 // pred_fallthru
      _
  $region6: #{inverted_residual_forward.2} parent=0 // loop_footer
    %s15 = sadd.s32 1, %s11
  $region7: #{inverted_residual_forward.2} parent=0 // loop_footer_branch
    %10 = sbr.rel target = $region3
  $region8: #{inverted_residual_forward.2} parent=0 // loop_exit
    _

// kernel: inverted_residual_forward.3
$region0: #{inverted_residual_forward.3}
  #allocation0 [shape = 'u32[]', space=smem, size = 0x4, offset = 0x4, fixed_abs, tag = 'smem constant byte address 0x4 - core index']
  #allocation1 [shape = 'u32[144,128]{1,0:T(1,128)}', space=vmem, size = 0x12000, scoped, tag = 'internal scratch']
  #allocation2 [shape = 'f32[18,18,8]{2,1,0:T(8,128)}', space=vmem, size = 0x36000, scoped, tag = 'scratch operand']
  %s0 = inlined_call_operand.vmem [shape: f32[2,16,16,4], index: 0, kind: input, shape index: {}]
  %s1 = inlined_call_operand.vmem [shape: f32[4,8], index: 1, kind: input, shape index: {}]
  %s2 = inlined_call_operand.vmem [shape: f32[1,8], index: 2, kind: input, shape index: {}]
  %s3 = inlined_call_operand.vmem [shape: f32[9,8], index: 3, kind: input, shape index: {}]
  %s4 = inlined_call_operand.vmem [shape: f32[1,8], index: 4, kind: input, shape index: {}]
  %s5 = inlined_call_operand.vmem [shape: f32[8,8], index: 5, kind: input, shape index: {}]
  %s6 = inlined_call_operand.vmem [shape: f32[1,8], index: 6, kind: input, shape index: {}]
  %s7 = inlined_call_operand.vmem [shape: f32[2,8,8,8], index: 7, kind: output, shape index: {}]
  %s8 = sld [smem:[#allocation0]]
  $region61: #{inverted_residual_forward.3} parent=0
    _
  %s10 = ssub.s32 1, %s8
  %s11 = scalar_select 0, %s10, %s8
  loop: start=0, step=1, limit=4
  $region2: #{inverted_residual_forward.3} parent=0 // loop_pre_header
    _
  $region3: #{inverted_residual_forward.3} parent=0 // loop_header
    %s13 = sphi 0, %s17
    %p14 = scmp.ge.s32.totalorder %s13, 4
    %s23 = sphi 0, %s25
    %s26 = sphi 0, %s23
    %s27 = sphi 0, %s26
    %s43 = sphi 0, %s27
    %s47 = sphi 0, %s47
    %s49 = sphi 0, %s47
    %s50 = sphi 0, %s49
    %s64 = sphi 0, %s50
    %s68 = sphi 0, %s68
    %s70 = sphi 0, %s68
    %s71 = sphi 0, %s70
    %s85 = sphi 0, %s71
    %s89 = sphi 0, %s89
    %s91 = sphi 0, %s89
    %s92 = sphi 0, %s91
    %s106 = sphi 0, %s92
    %s110 = sphi 0, %s110
    %s112 = sphi 0, %s110
    %s113 = sphi 0, %s112
    %s127 = sphi 0, %s113
    %s131 = sphi 0, %s131
    %s133 = sphi 0, %s131
    %s134 = sphi 0, %s133
    %s148 = sphi 0, %s134
    %s152 = sphi 0, %s152
    %s154 = sphi 0, %s152
    %s155 = sphi 0, %s154
    %s169 = sphi 0, %s155
    %s175 = sphi 0, %s177
    %s178 = sphi 0, %s175
    %s179 = sphi 0, %s178
    %s195 = sphi 0, %s179
  $region4: #{inverted_residual_forward.3} parent=0 // loop_header_branch
    %16 = sbr.rel (%p14) target = $region8
  $region5: #{inverted_residual_forward.3} parent=0 // loop_body
    %s18 = ssub.s32 %s13, 1
    %s19 = ssub.s32 %s13, 2
    %s20 = sadd.s32 %s13, 1
    %s21 = ssub.s32 %s13, %s20
    %p22 = scmp.eq.s32.totalorder %s21, 0
    %s24 = sadd.s32 %s23, 1
    %s25 = scalar_select %p22, %s23, %s24
    %p28 = pneg %p22
    %p29 = scmp.eq.s32.totalorder %s13, 1
    %p30 = por %p28, %p29
    %p31 = scmp.ne.s32.totalorder %s23, %s26
    %p32 = scmp.eq.s32.totalorder %s13, 0
    %p33 = por %p31, %p32
    %p34 = scmp.ne.s32.totalorder %s23, %s26
    %p35 = scmp.eq.s32.totalorder %s18, 1
    %p36 = por %p34, %p35
    %p37 = scmp.ne.s32.totalorder %s26, %s27
    %p38 = scmp.eq.s32.totalorder %s18, 0
    %p39 = por %p37, %p38
    %p40 = scmp.ne.s32.totalorder %s26, %s27
    %p41 = scmp.eq.s32.totalorder %s19, 1
    %p42 = por %p40, %p41
    %p44 = scmp.ne.s32.totalorder %s27, %s43
    %p45 = scmp.eq.s32.totalorder %s19, 0
    %p46 = por %p44, %p45
    %s48 = sadd.s32 %s47, 1
    %p51 = scmp.eq.s32.totalorder %s13, 1
    %p52 = scmp.ne.s32.totalorder %s47, %s49
    %p53 = scmp.eq.s32.totalorder %s13, 0
    %p54 = por %p52, %p53
    %p55 = scmp.ne.s32.totalorder %s47, %s49
    %p56 = scmp.eq.s32.totalorder %s18, 1
    %p57 = por %p55, %p56
    %p58 = scmp.ne.s32.totalorder %s49, %s50
    %p59 = scmp.eq.s32.totalorder %s18, 0
    %p60 = por %p58, %p59
    %p61 = scmp.ne.s32.totalorder %s49, %s50
    %p62 = scmp.eq.s32.totalorder %s19, 1
    %p63 = por %p61, %p62
    %p65 = scmp.ne.s32.totalorder %s50, %s64
    %p66 = scmp.eq.s32.totalorder %s19, 0
    %p67 = por %p65, %p66
    %s69 = sadd.s32 %s68, 1
    %p72 = scmp.eq.s32.totalorder %s13, 1
    %p73 = scmp.ne.s32.totalorder %s68, %s70
    %p74 = scmp.eq.s32.totalorder %s13, 0
    %p75 = por %p73, %p74
    %p76 = scmp.ne.s32.totalorder %s68, %s70
    %p77 = scmp.eq.s32.totalorder %s18, 1
    %p78 = por %p76, %p77
    %p79 = scmp.ne.s32.totalorder %s70, %s71
    %p80 = scmp.eq.s32.totalorder %s18, 0
    %p81 = por %p79, %p80
    %p82 = scmp.ne.s32.totalorder %s70, %s71
    %p83 = scmp.eq.s32.totalorder %s19, 1
    %p84 = por %p82, %p83
    %p86 = scmp.ne.s32.totalorder %s71, %s85
    %p87 = scmp.eq.s32.totalorder %s19, 0
    %p88 = por %p86, %p87
    %s90 = sadd.s32 %s89, 1
    %p93 = scmp.eq.s32.totalorder %s13, 1
    %p94 = scmp.ne.s32.totalorder %s89, %s91
    %p95 = scmp.eq.s32.totalorder %s13, 0
    %p96 = por %p94, %p95
    %p97 = scmp.ne.s32.totalorder %s89, %s91
    %p98 = scmp.eq.s32.totalorder %s18, 1
    %p99 = por %p97, %p98
    %p100 = scmp.ne.s32.totalorder %s91, %s92
    %p101 = scmp.eq.s32.totalorder %s18, 0
    %p102 = por %p100, %p101
    %p103 = scmp.ne.s32.totalorder %s91, %s92
    %p104 = scmp.eq.s32.totalorder %s19, 1
    %p105 = por %p103, %p104
    %p107 = scmp.ne.s32.totalorder %s92, %s106
    %p108 = scmp.eq.s32.totalorder %s19, 0
    %p109 = por %p107, %p108
    %s111 = sadd.s32 %s110, 1
    %p114 = scmp.eq.s32.totalorder %s13, 1
    %p115 = scmp.ne.s32.totalorder %s110, %s112
    %p116 = scmp.eq.s32.totalorder %s13, 0
    %p117 = por %p115, %p116
    %p118 = scmp.ne.s32.totalorder %s110, %s112
    %p119 = scmp.eq.s32.totalorder %s18, 1
    %p120 = por %p118, %p119
    %p121 = scmp.ne.s32.totalorder %s112, %s113
    %p122 = scmp.eq.s32.totalorder %s18, 0
    %p123 = por %p121, %p122
    %p124 = scmp.ne.s32.totalorder %s112, %s113
    %p125 = scmp.eq.s32.totalorder %s19, 1
    %p126 = por %p124, %p125
    %p128 = scmp.ne.s32.totalorder %s113, %s127
    %p129 = scmp.eq.s32.totalorder %s19, 0
    %p130 = por %p128, %p129
    %s132 = sadd.s32 %s131, 1
    %p135 = scmp.eq.s32.totalorder %s13, 1
    %p136 = scmp.ne.s32.totalorder %s131, %s133
    %p137 = scmp.eq.s32.totalorder %s13, 0
    %p138 = por %p136, %p137
    %p139 = scmp.ne.s32.totalorder %s131, %s133
    %p140 = scmp.eq.s32.totalorder %s18, 1
    %p141 = por %p139, %p140
    %p142 = scmp.ne.s32.totalorder %s133, %s134
    %p143 = scmp.eq.s32.totalorder %s18, 0
    %p144 = por %p142, %p143
    %p145 = scmp.ne.s32.totalorder %s133, %s134
    %p146 = scmp.eq.s32.totalorder %s19, 1
    %p147 = por %p145, %p146
    %p149 = scmp.ne.s32.totalorder %s134, %s148
    %p150 = scmp.eq.s32.totalorder %s19, 0
    %p151 = por %p149, %p150
    %s153 = sadd.s32 %s152, 1
    %p156 = scmp.eq.s32.totalorder %s13, 1
    %p157 = scmp.ne.s32.totalorder %s152, %s154
    %p158 = scmp.eq.s32.totalorder %s13, 0
    %p159 = por %p157, %p158
    %p160 = scmp.ne.s32.totalorder %s152, %s154
    %p161 = scmp.eq.s32.totalorder %s18, 1
    %p162 = por %p160, %p161
    %p163 = scmp.ne.s32.totalorder %s154, %s155
    %p164 = scmp.eq.s32.totalorder %s18, 0
    %p165 = por %p163, %p164
    %p166 = scmp.ne.s32.totalorder %s154, %s155
    %p167 = scmp.eq.s32.totalorder %s19, 1
    %p168 = por %p166, %p167
    %p170 = scmp.ne.s32.totalorder %s155, %s169
    %p171 = scmp.eq.s32.totalorder %s19, 0
    %p172 = por %p170, %p171
    %s173 = ssub.s32 %s13, %s20
    %p174 = scmp.eq.s32.totalorder %s173, 0
    %s176 = sadd.s32 %s175, 1
    %s177 = scalar_select %p174, %s175, %s176
    %p180 = pneg %p174
    %p181 = scmp.eq.s32.totalorder %s13, 1
    %p182 = por %p180, %p181
    %p183 = scmp.ne.s32.totalorder %s175, %s178
    %p184 = scmp.eq.s32.totalorder %s13, 0
    %p185 = por %p183, %p184
    %p186 = scmp.ne.s32.totalorder %s175, %s178
    %p187 = scmp.eq.s32.totalorder %s18, 1
    %p188 = por %p186, %p187
    %p189 = scmp.ne.s32.totalorder %s178, %s179
    %p190 = scmp.eq.s32.totalorder %s18, 0
    %p191 = por %p189, %p190
    %p192 = scmp.ne.s32.totalorder %s178, %s179
    %p193 = scmp.eq.s32.totalorder %s19, 1
    %p194 = por %p192, %p193
    %p196 = scmp.ne.s32.totalorder %s179, %s195
    %p197 = scmp.eq.s32.totalorder %s19, 0
    %p198 = por %p196, %p197
    %p199 = scmp.le.s32.totalorder 1, %s13
    %p200 = scmp.lt.s32.totalorder %s13, 3
    %p201 = pnand %p199, %p200
    %p202 = pneg %p201
    // Predicated region
    $region9: #{inverted_residual_forward.3} parent=5 // pred_check
      _
    $region10: #{inverted_residual_forward.3} parent=5 // pred_check_branch
      %204 = sbr.rel (%p201) target = $region12
    $region11: #{inverted_residual_forward.3} parent=5 // pred_region
      %s205 = ssub.s32 %s13, 1
      // Predicated region
      $region13: #{inverted_residual_forward.3} parent=11 // pred_check
        %p206 = pneg %p60
      $region14: #{inverted_residual_forward.3} parent=11 // pred_check_branch
        %208 = sbr.rel (%p206) target = $region16
      $region15: #{inverted_residual_forward.3} parent=11 // pred_region
        _
      $region16: #{inverted_residual_forward.3} parent=11 // pred_fallthru
        _
      // Predicated region
      $region17: #{inverted_residual_forward.3} parent=11 // pred_check
        %p209 = pneg %p81
      $region18: #{inverted_residual_forward.3} parent=11 // pred_check_branch
        %211 = sbr.rel (%p209) target = $region20
      $region19: #{inverted_residual_forward.3} parent=11 // pred_region
        _
      $region20: #{inverted_residual_forward.3} parent=11 // pred_fallthru
        _
      // Predicated region
      $region21: #{inverted_residual_forward.3} parent=11 // pred_check
        %p212 = pneg %p102
      $region22: #{inverted_residual_forward.3} parent=11 // pred_check_branch
        %214 = sbr.rel (%p212) target = $region24
      $region23: #{inverted_residual_forward.3} parent=11 // pred_region
        _
      $region24: #{inverted_residual_forward.3} parent=11 // pred_fallthru
        _
      // Predicated region
      $region25: #{inverted_residual_forward.3} parent=11 // pred_check
        %p215 = pneg %p123
      $region26: #{inverted_residual_forward.3} parent=11 // pred_check_branch
        %217 = sbr.rel (%p215) target = $region28
      $region27: #{inverted_residual_forward.3} parent=11 // pred_region
        _
      $region28: #{inverted_residual_forward.3} parent=11 // pred_fallthru
        _
      // Predicated region
      $region29: #{inverted_residual_forward.3} parent=11 // pred_check
        %p218 = pneg %p144
      $region30: #{inverted_residual_forward.3} parent=11 // pred_check_branch
        %220 = sbr.rel (%p218) target = $region32
      $region31: #{inverted_residual_forward.3} parent=11 // pred_region
        _
      $region32: #{inverted_residual_forward.3} parent=11 // pred_fallthru
        _
      // Predicated region
      $region33: #{inverted_residual_forward.3} parent=11 // pred_check
        %p221 = pneg %p165
      $region34: #{inverted_residual_forward.3} parent=11 // pred_check_branch
        %223 = sbr.rel (%p221) target = $region36
      $region35: #{inverted_residual_forward.3} parent=11 // pred_region
        _
      $region36: #{inverted_residual_forward.3} parent=11 // pred_fallthru
        _
    $region12: #{inverted_residual_forward.3} parent=5 // pred_fallthru
      _
    %p224 = scmp.lt.s32.totalorder %s13, 2
    // Predicated region
    $region37: #{inverted_residual_forward.3} parent=5 // pred_check
      %p225 = pneg %p224
    $region38: #{inverted_residual_forward.3} parent=5 // pred_check_branch
      %227 = sbr.rel (%p225) target = $region40
    $region39: #{inverted_residual_forward.3} parent=5 // pred_region
      // Predicated region
      $region41: #{inverted_residual_forward.3} parent=39 // pred_check
        %p228 = pneg %p33
      $region42: #{inverted_residual_forward.3} parent=39 // pred_check_branch
        %230 = sbr.rel (%p228) target = $region44
      $region43: #{inverted_residual_forward.3} parent=39 // pred_region
        %p231 = scmp.lt.s32.totalorder %s13, 1
        %s232 = scalar_select %p231, %s13, 1
        %s233 = smul.addr %s232, 32
        %s234 = smul.addr %s233, 8
        %s235 = scalar_lea.vmem %s0, %s234
      $region44: #{inverted_residual_forward.3} parent=39 // pred_fallthru
        _
    $region40: #{inverted_residual_forward.3} parent=5 // pred_fallthru
      _
    %p236 = scmp.le.s32.totalorder 1, %s13
    %p237 = scmp.lt.s32.totalorder %s13, 3
    %p238 = pnand %p236, %p237
    %p239 = pneg %p238
    // Predicated region
    $region45: #{inverted_residual_forward.3} parent=5 // pred_check
      _
    $region46: #{inverted_residual_forward.3} parent=5 // pred_check_branch
      %241 = sbr.rel (%p238) target = $region48
    $region47: #{inverted_residual_forward.3} parent=5 // pred_region
      %s242 = ssub.s32 %s13, 1
      %p243 = scmp.lt.s32.totalorder %s18, 1
      %s244 = scalar_select %p243, %s18, 1
      %s245 = smul.addr %s244, 32
      %s246 = smul.addr %s245, 8
      %s247 = scalar_lea.vmem %s0, %s246
      %p248 = pneg %p39
      %p249 = pneg %p36
      %p250 = pneg %p60
      %p251 = pneg %p57
      %p252 = pneg %p81
      %p253 = pneg %p78
      %p254 = pneg %p102
      %p255 = pneg %p99
      %p256 = pneg %p123
      %p257 = pneg %p120
      %p258 = pneg %p144
      %p259 = pneg %p141
      %p260 = pneg %p165
      %p261 = pneg %p162
      %p262 = pneg %p191
      %p263 = pneg %p188
      %p264 = scmp.lt.s32.totalorder %s18, 1
      %s265 = scalar_select %p264, %s18, 1
      %s266 = smul.addr %s265, 8
      %s267 = smul.addr %s266, 8
      %s268 = scalar_lea.vmem %s7, %s267
      %p269 = scmp.lt.s32.totalorder %s18, 1
      %s270 = scalar_select %p269, %s18, 1
      %s271 = smul.addr %s270, 32
      %s272 = smul.addr %s271, 8
      %s273 = scalar_lea.vmem %s0, %s272
      %p274 = scmp.lt.s32.totalorder %s18, 1
      %s275 = scalar_select %p274, %s18, 1
      %s276 = smul.addr %s275, 8
      %s277 = smul.addr %s276, 8
      %s278 = scalar_lea.vmem %s7, %s277
      %v279 = vld [vmem:[%s273] sm:$0xff]
      %v280 = vld [vmem:[%s273 + $0x8] sm:$0xff]
      %v281 = vld [vmem:[%s273 + $0x10] sm:$0xff]
      %v282 = vld [vmem:[%s273 + $0x18] sm:$0xff]
      %v283 = vld [vmem:[%s273 + $0x20] sm:$0xff]
      %v284 = vld [vmem:[%s273 + $0x28] sm:$0xff]
      %v285 = vld [vmem:[%s273 + $0x30] sm:$0xff]
      %v286 = vld [vmem:[%s273 + $0x38] sm:$0xff]
      %v287 = vld [vmem:[%s273 + $0x40] sm:$0xff]
      %v288 = vld [vmem:[%s273 + $0x48] sm:$0xff]
      %v289 = vld [vmem:[%s273 + $0x50] sm:$0xff]
      %v290 = vld [vmem:[%s273 + $0x58] sm:$0xff]
      %v291 = vld [vmem:[%s273 + $0x60] sm:$0xff]
      %v292 = vld [vmem:[%s273 + $0x68] sm:$0xff]
      %v293 = vld [vmem:[%s273 + $0x70] sm:$0xff]
      %v294 = vld [vmem:[%s273 + $0x78] sm:$0xff]
      %v295 = vld [vmem:[%s273 + $0x80] sm:$0xff]
      %v296 = vld [vmem:[%s273 + $0x88] sm:$0xff]
      %v297 = vld [vmem:[%s273 + $0x90] sm:$0xff]
      %v298 = vld [vmem:[%s273 + $0x98] sm:$0xff]
      %v299 = vld [vmem:[%s273 + $0xa0] sm:$0xff]
      %v300 = vld [vmem:[%s273 + $0xa8] sm:$0xff]
      %v301 = vld [vmem:[%s273 + $0xb0] sm:$0xff]
      %v302 = vld [vmem:[%s273 + $0xb8] sm:$0xff]
      %v303 = vld [vmem:[%s273 + $0xc0] sm:$0xff]
      %v304 = vld [vmem:[%s273 + $0xc8] sm:$0xff]
      %v305 = vld [vmem:[%s273 + $0xd0] sm:$0xff]
      %v306 = vld [vmem:[%s273 + $0xd8] sm:$0xff]
      %v307 = vld [vmem:[%s273 + $0xe0] sm:$0xff]
      %v308 = vld [vmem:[%s273 + $0xe8] sm:$0xff]
      %v309 = vld [vmem:[%s273 + $0xf0] sm:$0xff]
      %v310 = vld [vmem:[%s273 + $0xf8] sm:$0xff]
      %v311 = vld [vmem:[%s1] sm:$0xf]
      %v312 = vld [vmem:[%s2] sm:$0x1]
      %v314 = vlaneseq
      %v315 = vshrl.u32 %v314, 7
      %v316 = vsub.s32 0, %v315
      %v317 = vrot.slane %v312, %v316
      %vm319 = vcmask 31744
      %v321 = vsel %vm319, %v279, 0
      %v324 = vsel %vm319, %v280, 0
      %v327 = vsel %vm319, %v281, 0
      %v330 = vsel %vm319, %v282, 0
      %v333 = vsel %vm319, %v283, 0
      %v336 = vsel %vm319, %v284, 0
      %v339 = vsel %vm319, %v285, 0
      %v342 = vsel %vm319, %v286, 0
      %v345 = vsel %vm319, %v287, 0
      %v348 = vsel %vm319, %v288, 0
      %v351 = vsel %vm319, %v289, 0
      %v354 = vsel %vm319, %v290, 0
      %v357 = vsel %vm319, %v291, 0
      %v360 = vsel %vm319, %v292, 0
      %v363 = vsel %vm319, %v293, 0
      %v366 = vsel %vm319, %v294, 0
      %v369 = vsel %vm319, %v295, 0
      %v372 = vsel %vm319, %v296, 0
      %v375 = vsel %vm319, %v297, 0
      %v378 = vsel %vm319, %v298, 0
      %v381 = vsel %vm319, %v299, 0
      %v384 = vsel %vm319, %v300, 0
      %v387 = vsel %vm319, %v301, 0
      %v390 = vsel %vm319, %v302, 0
      %v393 = vsel %vm319, %v303, 0
      %v396 = vsel %vm319, %v304, 0
      %v399 = vsel %vm319, %v305, 0
      %v402 = vsel %vm319, %v306, 0
      %v405 = vsel %vm319, %v307, 0
      %v408 = vsel %vm319, %v308, 0
      %v411 = vsel %vm319, %v309, 0
      %v414 = vsel %vm319, %v310, 0
      %vm416 = vcmask 1043456
      %v418 = vsel %vm416, %v311, 0
      %420 = vmatprep.subr.mxu0 0.0
      %421 = vmatpush1.msra.mxu0 %v418
      %422 = vmatprep.subr.mxu0 0.0
      %423 = vmatpush1.msra.mxu0 0.0
      %424 = vmatprep.subr.mxu0 0.0
      %425 = vmatpush1.msra.mxu0 0.0
      %426 = vmatprep.subr.mxu0 0.0
      %427 = vmatpush1.msra.mxu0 0.0
      %428 = vmatprep.subr.mxu0 0.0
      %429 = vmatpush1.msra.mxu0 0.0
      %430 = vmatprep.subr.mxu0 0.0
      %431 = vmatpush1.msra.mxu0 0.0
      %432 = vmatprep.subr.mxu0 0.0
      %433 = vmatpush1.msra.mxu0 0.0
      %434 = vmatprep.subr.mxu0 0.0
      %435 = vmatpush1.msra.mxu0 0.0
      %436 = vmatprep.subr.mxu0 0.0
      %437 = vmatpush1.msra.mxu0 0.0
      %438 = vmatprep.subr.mxu0 0.0
      %439 = vmatpush1.msra.mxu0 0.0
      %440 = vmatprep.subr.mxu0 0.0
      %441 = vmatpush1.msra.mxu0 0.0
      %442 = vmatprep.subr.mxu0 0.0
      %443 = vmatpush1.msra.mxu0 0.0
      %444 = vmatprep.subr.mxu0 0.0
      %445 = vmatpush1.msra.mxu0 0.0
      %446 = vmatprep.subr.mxu0 0.0
      %447 = vmatpush1.msra.mxu0 0.0
      %448 = vmatprep.subr.mxu0 0.0
      %449 = vmatpush1.msra.mxu0 0.0
      %450 = vmatprep.subr.mxu0 0.0
      %451 = vmatpush1.msra.mxu0 0.0
      %452 = vmatprep.subr.mxu0 0.0
      %453 = vmatpush1.msra.mxu0 0.0
      %454 = vmatprep.subr.mxu0 0.0
      %455 = vmatpush1.msra.mxu0 0.0
      %456 = vmatprep.subr.mxu0 0.0
      %457 = vmatpush1.msra.mxu0 0.0
      %458 = vmatprep.subr.mxu0 0.0
      %459 = vmatpush1.msra.mxu0 0.0
      %460 = vmatprep.subr.mxu0 0.0
      %461 = vmatpush1.msra.mxu0 0.0
      %462 = vmatprep.subr.mxu0 0.0
      %463 = vmatpush1.msra.mxu0 0.0
      %464 = vmatprep.subr.mxu0 0.0
      %465 = vmatpush1.msra.mxu0 0.0
      %466 = vmatprep.subr.mxu0 0.0
      %467 = vmatpush1.msra.mxu0 0.0
      %468 = vmatprep.subr.mxu0 0.0
      %469 = vmatpush1.msra.mxu0 0.0
      %470 = vmatprep.subr.mxu0 0.0
      %471 = vmatpush1.msra.mxu0 0.0
      %472 = vmatprep.subr.mxu0 0.0
      %473 = vmatpush1.msra.mxu0 0.0
      %474 = vmatprep.subr.mxu0 0.0
      %475 = vmatpush1.msra.mxu0 0.0
      %476 = vmatprep.subr.mxu0 0.0
      %477 = vmatpush1.msra.mxu0 0.0
      %478 = vmatprep.subr.mxu0 0.0
      %479 = vmatpush1.msra.mxu0 0.0
      %480 = vmatprep.subr.mxu0 0.0
      %481 = vmatpush1.msra.mxu0 0.0
      %482 = vmatprep.subr.mxu0 0.0
      %483 = vmatpush1.msra.mxu0 0.0
      %484 = vmatprep.mubr.f32.mxu0 0.0
      %485 = vmatmul.mubr.f32.gmra.mrb[0].mxu0 %v321
      %v486 = vpop.f32.mrb[0].mxu0
      %v487 = vadd.f32 %v317, %v486
      %v488 = vpop.f32.mrb[0].mxu0
      %489 = vmatprep.mubr.f32.mxu0 0.0
      %490 = vmatmul.mubr.f32.gmra.mrb[0].mxu0 %v324
      %v491 = vpop.f32.mrb[0].mxu0
      %v492 = vadd.f32 %v317, %v491
      %v493 = vpop.f32.mrb[0].mxu0
      %494 = vmatprep.mubr.f32.mxu0 0.0
      %495 = vmatmul.mubr.f32.gmra.mrb[0].mxu0 %v327
      %v496 = vpop.f32.mrb[0].mxu0
      %v497 = vadd.f32 %v317, %v496
      %v498 = vpop.f32.mrb[0].mxu0
      %499 = vmatprep.mubr.f32.mxu0 0.0
      %500 = vmatmul.mubr.f32.gmra.mrb[0].mxu0 %v330
      %v501 = vpop.f32.mrb[0].mxu0
      %v502 = vadd.f32 %v317, %v501
      %v503 = vpop.f32.mrb[0].mxu0
      %504 = vmatprep.mubr.f32.mxu0 0.0
      %505 = vmatmul.mubr.f32.gmra.mrb[0].mxu0 %v333
      %v506 = vpop.f32.mrb[0].mxu0
      %v507 = vadd.f32 %v317, %v506
      %v508 = vpop.f32.mrb[0].mxu0
      %509 = vmatprep.mubr.f32.mxu0 0.0
      %510 = vmatmul.mubr.f32.gmra.mrb[0].mxu0 %v336
      %v511 = vpop.f32.mrb[0].mxu0
      %v512 = vadd.f32 %v317, %v511
      %v513 = vpop.f32.mrb[0].mxu0
      %514 = vmatprep.mubr.f32.mxu0 0.0
      %515 = vmatmul.mubr.f32.gmra.mrb[0].mxu0 %v339
      %v516 = vpop.f32.mrb[0].mxu0
      %v517 = vadd.f32 %v317, %v516
      %v518 = vpop.f32.mrb[0].mxu0
      %519 = vmatprep.mubr.f32.mxu0 0.0
      %520 = vmatmul.mubr.f32.gmra.mrb[0].mxu0 %v342
      %v521 = vpop.f32.mrb[0].mxu0
      %v522 = vadd.f32 %v317, %v521
      %v523 = vpop.f32.mrb[0].mxu0
      %524 = vmatprep.mubr.f32.mxu0 0.0
      %525 = vmatmul.mubr.f32.gmra.mrb[0].mxu0 %v345
      %v526 = vpop.f32.mrb[0].mxu0
      %v527 = vadd.f32 %v317, %v526
      %v528 = vpop.f32.mrb[0].mxu0
      %529 = vmatprep.mubr.f32.mxu0 0.0
      %530 = vmatmul.mubr.f32.gmra.mrb[0].mxu0 %v348
      %v531 = vpop.f32.mrb[0].mxu0
      %v532 = vadd.f32 %v317, %v531
      %v533 = vpop.f32.mrb[0].mxu0
      %534 = vmatprep.mubr.f32.mxu0 0.0
      %535 = vmatmul.mubr.f32.gmra.mrb[0].mxu0 %v351
      %v536 = vpop.f32.mrb[0].mxu0
      %v537 = vadd.f32 %v317, %v536
      %v538 = vpop.f32.mrb[0].mxu0
      %539 = vmatprep.mubr.f32.mxu0 0.0
      %540 = vmatmul.mubr.f32.gmra.mrb[0].mxu0 %v354
      %v541 = vpop.f32.mrb[0].mxu0
      %v542 = vadd.f32 %v317, %v541
      %v543 = vpop.f32.mrb[0].mxu0
      %544 = vmatprep.mubr.f32.mxu0 0.0
      %545 = vmatmul.mubr.f32.gmra.mrb[0].mxu0 %v357
      %v546 = vpop.f32.mrb[0].mxu0
      %v547 = vadd.f32 %v317, %v546
      %v548 = vpop.f32.mrb[0].mxu0
      %549 = vmatprep.mubr.f32.mxu0 0.0
      %550 = vmatmul.mubr.f32.gmra.mrb[0].mxu0 %v360
      %v551 = vpop.f32.mrb[0].mxu0
      %v552 = vadd.f32 %v317, %v551
      %v553 = vpop.f32.mrb[0].mxu0
      %554 = vmatprep.mubr.f32.mxu0 0.0
      %555 = vmatmul.mubr.f32.gmra.mrb[0].mxu0 %v363
      %v556 = vpop.f32.mrb[0].mxu0
      %v557 = vadd.f32 %v317, %v556
      %v558 = vpop.f32.mrb[0].mxu0
      %559 = vmatprep.mubr.f32.mxu0 0.0
      %560 = vmatmul.mubr.f32.gmra.mrb[0].mxu0 %v366
      %v561 = vpop.f32.mrb[0].mxu0
      %v562 = vadd.f32 %v317, %v561
      %v563 = vpop.f32.mrb[0].mxu0
      %564 = vmatprep.mubr.f32.mxu0 0.0
      %565 = vmatmul.mubr.f32.gmra.mrb[0].mxu0 %v369
      %v566 = vpop.f32.mrb[0].mxu0
      %v567 = vadd.f32 %v317, %v566
      %v568 = vpop.f32.mrb[0].mxu0
      %569 = vmatprep.mubr.f32.mxu0 0.0
      %570 = vmatmul.mubr.f32.gmra.mrb[0].mxu0 %v372
      %v571 = vpop.f32.mrb[0].mxu0
      %v572 = vadd.f32 %v317, %v571
      %v573 = vpop.f32.mrb[0].mxu0
      %574 = vmatprep.mubr.f32.mxu0 0.0
      %575 = vmatmul.mubr.f32.gmra.mrb[0].mxu0 %v375
      %v576 = vpop.f32.mrb[0].mxu0
      %v577 = vadd.f32 %v317, %v576
      %v578 = vpop.f32.mrb[0].mxu0
      %579 = vmatprep.mubr.f32.mxu0 0.0
      %580 = vmatmul.mubr.f32.gmra.mrb[0].mxu0 %v378
      %v581 = vpop.f32.mrb[0].mxu0
      %v582 = vadd.f32 %v317, %v581
      %v583 = vpop.f32.mrb[0].mxu0
      %584 = vmatprep.mubr.f32.mxu0 0.0
      %585 = vmatmul.mubr.f32.gmra.mrb[0].mxu0 %v381
      %v586 = vpop.f32.mrb[0].mxu0
      %v587 = vadd.f32 %v317, %v586
      %v588 = vpop.f32.mrb[0].mxu0
      %589 = vmatprep.mubr.f32.mxu0 0.0
      %590 = vmatmul.mubr.f32.gmra.mrb[0].mxu0 %v384
      %v591 = vpop.f32.mrb[0].mxu0
      %v592 = vadd.f32 %v317, %v591
      %v593 = vpop.f32.mrb[0].mxu0
      %594 = vmatprep.mubr.f32.mxu0 0.0
      %595 = vmatmul.mubr.f32.gmra.mrb[0].mxu0 %v387
      %v596 = vpop.f32.mrb[0].mxu0
      %v597 = vadd.f32 %v317, %v596
      %v598 = vpop.f32.mrb[0].mxu0
      %599 = vmatprep.mubr.f32.mxu0 0.0
      %600 = vmatmul.mubr.f32.gmra.mrb[0].mxu0 %v390
      %v601 = vpop.f32.mrb[0].mxu0
      %v602 = vadd.f32 %v317, %v601
      %v603 = vpop.f32.mrb[0].mxu0
      %604 = vmatprep.mubr.f32.mxu0 0.0
      %605 = vmatmul.mubr.f32.gmra.mrb[0].mxu0 %v393
      %v606 = vpop.f32.mrb[0].mxu0
      %v607 = vadd.f32 %v317, %v606
      %v608 = vpop.f32.mrb[0].mxu0
      %609 = vmatprep.mubr.f32.mxu0 0.0
      %610 = vmatmul.mubr.f32.gmra.mrb[0].mxu0 %v396
      %v611 = vpop.f32.mrb[0].mxu0
      %v612 = vadd.f32 %v317, %v611
      %v613 = vpop.f32.mrb[0].mxu0
      %614 = vmatprep.mubr.f32.mxu0 0.0
      %615 = vmatmul.mubr.f32.gmra.mrb[0].mxu0 %v399
      %v616 = vpop.f32.mrb[0].mxu0
      %v617 = vadd.f32 %v317, %v616
      %v618 = vpop.f32.mrb[0].mxu0
      %619 = vmatprep.mubr.f32.mxu0 0.0
      %620 = vmatmul.mubr.f32.gmra.mrb[0].mxu0 %v402
      %v621 = vpop.f32.mrb[0].mxu0
      %v622 = vadd.f32 %v317, %v621
      %v623 = vpop.f32.mrb[0].mxu0
      %624 = vmatprep.mubr.f32.mxu0 0.0
      %625 = vmatmul.mubr.f32.gmra.mrb[0].mxu0 %v405
      %v626 = vpop.f32.mrb[0].mxu0
      %v627 = vadd.f32 %v317, %v626
      %v628 = vpop.f32.mrb[0].mxu0
      %629 = vmatprep.mubr.f32.mxu0 0.0
      %630 = vmatmul.mubr.f32.gmra.mrb[0].mxu0 %v408
      %v631 = vpop.f32.mrb[0].mxu0
      %v632 = vadd.f32 %v317, %v631
      %v633 = vpop.f32.mrb[0].mxu0
      %634 = vmatprep.mubr.f32.mxu0 0.0
      %635 = vmatmul.mubr.f32.gmra.mrb[0].mxu0 %v411
      %v636 = vpop.f32.mrb[0].mxu0
      %v637 = vadd.f32 %v317, %v636
      %v638 = vpop.f32.mrb[0].mxu0
      %639 = vmatprep.mubr.f32.mxu0 0.0
      %640 = vmatmul.mubr.f32.gmra.mrb[0].mxu0 %v414
      %v641 = vpop.f32.mrb[0].mxu0
      %v642 = vadd.f32 %v317, %v641
      %v643 = vpop.f32.mrb[0].mxu0
      %644 = vdwg.mxu0
      %v645 = vmax.f32 %v487, 0.0
      %v646 = vmax.f32 %v492, 0.0
      %v647 = vmax.f32 %v497, 0.0
      %v648 = vmax.f32 %v502, 0.0
      %v649 = vmax.f32 %v507, 0.0
      %v650 = vmax.f32 %v512, 0.0
      %v651 = vmax.f32 %v517, 0.0
      %v652 = vmax.f32 %v522, 0.0
      %v653 = vmax.f32 %v527, 0.0
      %v654 = vmax.f32 %v532, 0.0
      %v655 = vmax.f32 %v537, 0.0
      %v656 = vmax.f32 %v542, 0.0
      %v657 = vmax.f32 %v547, 0.0
      %v658 = vmax.f32 %v552, 0.0
      %v659 = vmax.f32 %v557, 0.0
      %v660 = vmax.f32 %v562, 0.0
      %v661 = vmax.f32 %v567, 0.0
      %v662 = vmax.f32 %v572, 0.0
      %v663 = vmax.f32 %v577, 0.0
      %v664 = vmax.f32 %v582, 0.0
      %v665 = vmax.f32 %v587, 0.0
      %v666 = vmax.f32 %v592, 0.0
      %v667 = vmax.f32 %v597, 0.0
      %v668 = vmax.f32 %v602, 0.0
      %v669 = vmax.f32 %v607, 0.0
      %v670 = vmax.f32 %v612, 0.0
      %v671 = vmax.f32 %v617, 0.0
      %v672 = vmax.f32 %v622, 0.0
      %v673 = vmax.f32 %v627, 0.0
      %v674 = vmax.f32 %v632, 0.0
      %v675 = vmax.f32 %v637, 0.0
      %v676 = vmax.f32 %v642, 0.0
      %vm677 = vcmask 64512
      %678 = vst.msk [vmem:[#allocation2] sm:$0xff] %vm677, 0.0
      %679 = vst.msk [vmem:[#allocation2 + $0x8] sm:$0xff] %vm677, 0.0
      %vm680 = vcmask 58368
      %681 = vst.msk [vmem:[#allocation2 + $0x10] sm:$0x3] %vm680, 0.0
      %682 = vst.msk [vmem:[#allocation2 + $0x18] sm:$0xff] %vm677, 0.0
      %683 = vst.msk [vmem:[#allocation2 + $0x20] sm:$0xff] %vm677, 0.0
      %684 = vst.msk [vmem:[#allocation2 + $0x28] sm:$0x3] %vm680, 0.0
      %685 = vst.msk [vmem:[#allocation2 + $0x30] sm:$0xff] %vm677, 0.0
      %686 = vst.msk [vmem:[#allocation2 + $0x38] sm:$0xff] %vm677, 0.0
      %687 = vst.msk [vmem:[#allocation2 + $0x40] sm:$0x3] %vm680, 0.0
      %688 = vst.msk [vmem:[#allocation2 + $0x48] sm:$0xff] %vm677, 0.0
      %689 = vst.msk [vmem:[#allocation2 + $0x50] sm:$0xff] %vm677, 0.0
      %690 = vst.msk [vmem:[#allocation2 + $0x58] sm:$0x3] %vm680, 0.0
      %691 = vst.msk [vmem:[#allocation2 + $0x60] sm:$0xff] %vm677, 0.0
      %692 = vst.msk [vmem:[#allocation2 + $0x68] sm:$0xff] %vm677, 0.0
      %693 = vst.msk [vmem:[#allocation2 + $0x70] sm:$0x3] %vm680, 0.0
      %694 = vst.msk [vmem:[#allocation2 + $0x78] sm:$0xff] %vm677, 0.0
      %695 = vst.msk [vmem:[#allocation2 + $0x80] sm:$0xff] %vm677, 0.0
      %696 = vst.msk [vmem:[#allocation2 + $0x88] sm:$0x3] %vm680, 0.0
      %697 = vst.msk [vmem:[#allocation2 + $0x90] sm:$0xff] %vm677, 0.0
      %698 = vst.msk [vmem:[#allocation2 + $0x98] sm:$0xff] %vm677, 0.0
      %699 = vst.msk [vmem:[#allocation2 + $0xa0] sm:$0x3] %vm680, 0.0
      %700 = vst.msk [vmem:[#allocation2 + $0xa8] sm:$0xff] %vm677, 0.0
      %701 = vst.msk [vmem:[#allocation2 + $0xb0] sm:$0xff] %vm677, 0.0
      %702 = vst.msk [vmem:[#allocation2 + $0xb8] sm:$0x3] %vm680, 0.0
      %703 = vst.msk [vmem:[#allocation2 + $0xc0] sm:$0xff] %vm677, 0.0
      %704 = vst.msk [vmem:[#allocation2 + $0xc8] sm:$0xff] %vm677, 0.0
      %705 = vst.msk [vmem:[#allocation2 + $0xd0] sm:$0x3] %vm680, 0.0
      %706 = vst.msk [vmem:[#allocation2 + $0xd8] sm:$0xff] %vm677, 0.0
      %707 = vst.msk [vmem:[#allocation2 + $0xe0] sm:$0xff] %vm677, 0.0
      %708 = vst.msk [vmem:[#allocation2 + $0xe8] sm:$0x3] %vm680, 0.0
      %709 = vst.msk [vmem:[#allocation2 + $0xf0] sm:$0xff] %vm677, 0.0
      %710 = vst.msk [vmem:[#allocation2 + $0xf8] sm:$0xff] %vm677, 0.0
      %711 = vst.msk [vmem:[#allocation2 + $0x100] sm:$0x3] %vm680, 0.0
      %712 = vst.msk [vmem:[#allocation2 + $0x108] sm:$0xff] %vm677, 0.0
      %713 = vst.msk [vmem:[#allocation2 + $0x110] sm:$0xff] %vm677, 0.0
      %714 = vst.msk [vmem:[#allocation2 + $0x118] sm:$0x3] %vm680, 0.0
      %715 = vst.msk [vmem:[#allocation2 + $0x120] sm:$0xff] %vm677, 0.0
      %716 = vst.msk [vmem:[#allocation2 + $0x128] sm:$0xff] %vm677, 0.0
      %717 = vst.msk [vmem:[#allocation2 + $0x130] sm:$0x3] %vm680, 0.0
      %718 = vst.msk [vmem:[#allocation2 + $0x138] sm:$0xff] %vm677, 0.0
      %719 = vst.msk [vmem:[#allocation2 + $0x140] sm:$0xff] %vm677, 0.0
      %720 = vst.msk [vmem:[#allocation2 + $0x148] sm:$0x3] %vm680, 0.0
      %721 = vst.msk [vmem:[#allocation2 + $0x150] sm:$0xff] %vm677, 0.0
      %722 = vst.msk [vmem:[#allocation2 + $0x158] sm:$0xff] %vm677, 0.0
      %723 = vst.msk [vmem:[#allocation2 + $0x160] sm:$0x3] %vm680, 0.0
      %724 = vst.msk [vmem:[#allocation2 + $0x168] sm:$0xff] %vm677, 0.0
      %725 = vst.msk [vmem:[#allocation2 + $0x170] sm:$0xff] %vm677, 0.0
      %726 = vst.msk [vmem:[#allocation2 + $0x178] sm:$0x3] %vm680, 0.0
      %727 = vst.msk [vmem:[#allocation2 + $0x180] sm:$0xff] %vm677, 0.0
      %728 = vst.msk [vmem:[#allocation2 + $0x188] sm:$0xff] %vm677, 0.0
      %729 = vst.msk [vmem:[#allocation2 + $0x190] sm:$0x3] %vm680, 0.0
      %730 = vst.msk [vmem:[#allocation2 + $0x198] sm:$0xff] %vm677, 0.0
      %731 = vst.msk [vmem:[#allocation2 + $0x1a0] sm:$0xff] %vm677, 0.0
      %732 = vst.msk [vmem:[#allocation2 + $0x1a8] sm:$0x3] %vm680, 0.0
      %s733 = scalar_lea.vmem [#allocation2], 24
      %734 = vst.msk [vmem:[%s733 + $0x1] sm:$0xff] %vm677, %v645
      %735 = vst.msk [vmem:[%s733 + $0x9] sm:$0xff] %vm677, %v646
      %736 = vst.msk [vmem:[%s733 + $0x19] sm:$0xff] %vm677, %v647
      %737 = vst.msk [vmem:[%s733 + $0x21] sm:$0xff] %vm677, %v648
      %738 = vst.msk [vmem:[%s733 + $0x31] sm:$0xff] %vm677, %v649
      %739 = vst.msk [vmem:[%s733 + $0x39] sm:$0xff] %vm677, %v650
      %740 = vst.msk [vmem:[%s733 + $0x49] sm:$0xff] %vm677, %v651
      %741 = vst.msk [vmem:[%s733 + $0x51] sm:$0xff] %vm677, %v652
      %742 = vst.msk [vmem:[%s733 + $0x61] sm:$0xff] %vm677, %v653
      %743 = vst.msk [vmem:[%s733 + $0x69] sm:$0xff] %vm677, %v654
      %744 = vst.msk [vmem:[%s733 + $0x79] sm:$0xff] %vm677, %v655
      %745 = vst.msk [vmem:[%s733 + $0x81] sm:$0xff] %vm677, %v656
      %746 = vst.msk [vmem:[%s733 + $0x91] sm:$0xff] %vm677, %v657
      %747 = vst.msk [vmem:[%s733 + $0x99] sm:$0xff] %vm677, %v658
      %748 = vst.msk [vmem:[%s733 + $0xa9] sm:$0xff] %vm677, %v659
      %749 = vst.msk [vmem:[%s733 + $0xb1] sm:$0xff] %vm677, %v660
      %750 = vst.msk [vmem:[%s733 + $0xc1] sm:$0xff] %vm677, %v661
      %751 = vst.msk [vmem:[%s733 + $0xc9] sm:$0xff] %vm677, %v662
      %752 = vst.msk [vmem:[%s733 + $0xd9] sm:$0xff] %vm677, %v663
      %753 = vst.msk [vmem:[%s733 + $0xe1] sm:$0xff] %vm677, %v664
      %754 = vst.msk [vmem:[%s733 + $0xf1] sm:$0xff] %vm677, %v665
      %755 = vst.msk [vmem:[%s733 + $0xf9] sm:$0xff] %vm677, %v666
      %756 = vst.msk [vmem:[%s733 + $0x109] sm:$0xff] %vm677, %v667
      %757 = vst.msk [vmem:[%s733 + $0x111] sm:$0xff] %vm677, %v668
      %758 = vst.msk [vmem:[%s733 + $0x121] sm:$0xff] %vm677, %v669
      %759 = vst.msk [vmem:[%s733 + $0x129] sm:$0xff] %vm677, %v670
      %760 = vst.msk [vmem:[%s733 + $0x139] sm:$0xff] %vm677, %v671
      %761 = vst.msk [vmem:[%s733 + $0x141] sm:$0xff] %vm677, %v672
      %762 = vst.msk [vmem:[%s733 + $0x151] sm:$0xff] %vm677, %v673
      %763 = vst.msk [vmem:[%s733 + $0x159] sm:$0xff] %vm677, %v674
      %764 = vst.msk [vmem:[%s733 + $0x169] sm:$0xff] %vm677, %v675
      %765 = vst.msk [vmem:[%s733 + $0x171] sm:$0xff] %vm677, %v676
      %v766 = vld [vmem:[#allocation2] ss:$2 sm:$0xff]
      %s767 = scalar_lea.vmem [#allocation2], 48
      %v768 = vld [vmem:[%s767] ss:$2 sm:$0xff]
      %s769 = scalar_lea.vmem [#allocation2], 96
      %v770 = vld [vmem:[%s769] ss:$2 sm:$0xff]
      %s771 = scalar_lea.vmem [#allocation2], 144
      %v772 = vld [vmem:[%s771] ss:$2 sm:$0xff]
      %s773 = scalar_lea.vmem [#allocation2], 192
      %v774 = vld [vmem:[%s773] ss:$2 sm:$0xff]
      %s775 = scalar_lea.vmem [#allocation2], 240
      %v776 = vld [vmem:[%s775] ss:$2 sm:$0xff]
      %s777 = scalar_lea.vmem [#allocation2], 288
      %v778 = vld [vmem:[%s777] ss:$2 sm:$0xff]
      %s779 = scalar_lea.vmem [#allocation2], 336
      %v780 = vld [vmem:[%s779] ss:$2 sm:$0xff]
      %v781 = vld [vmem:[%s3] sm:$0x1]
      %v782 = vlaneseq
      %v783 = vshrl.u32 %v782, 7
      %v784 = vsub.s32 0, %v783
      %v785 = vrot.slane %v781, %v784
      %v786 = vmul.f32 %v766, %v785
      %v787 = vmul.f32 %v768, %v785
      %v788 = vmul.f32 %v770, %v785
      %v789 = vmul.f32 %v772, %v785
      %v790 = vmul.f32 %v774, %v785
      %v791 = vmul.f32 %v776, %v785
      %v792 = vmul.f32 %v778, %v785
      %v793 = vmul.f32 %v780, %v785
      %v794 = vadd.f32 %v786, 0.0
      %v795 = vadd.f32 %v787, 0.0
      %v796 = vadd.f32 %v788, 0.0
      %v797 = vadd.f32 %v789, 0.0
      %v798 = vadd.f32 %v790, 0.0
      %v799 = vadd.f32 %v791, 0.0
      %v800 = vadd.f32 %v792, 0.0
      %v801 = vadd.f32 %v793, 0.0
      %s802 = scalar_lea.vmem [#allocation2], 1
      %v803 = vld [vmem:[%s802] ss:$2 sm:$0xff]
      %s804 = scalar_lea.vmem [#allocation2], 49
      %v805 = vld [vmem:[%s804] ss:$2 sm:$0xff]
      %s806 = scalar_lea.vmem [#allocation2], 97
      %v807 = vld [vmem:[%s806] ss:$2 sm:$0xff]
      %s808 = scalar_lea.vmem [#allocation2], 145
      %v809 = vld [vmem:[%s808] ss:$2 sm:$0xff]
      %s810 = scalar_lea.vmem [#allocation2], 193
      %v811 = vld [vmem:[%s810] ss:$2 sm:$0xff]
      %s812 = scalar_lea.vmem [#allocation2], 241
      %v813 = vld [vmem:[%s812] ss:$2 sm:$0xff]
      %s814 = scalar_lea.vmem [#allocation2], 289
      %v815 = vld [vmem:[%s814] ss:$2 sm:$0xff]
      %s816 = scalar_lea.vmem [#allocation2], 337
      %v817 = vld [vmem:[%s816] ss:$2 sm:$0xff]
      %v818 = vld [vmem:[%s3 + $0x1] sm:$0x1]
      %v819 = vlaneseq
      %v820 = vshrl.u32 %v819, 7
      %v821 = vsub.s32 0, %v820
      %v822 = vrot.slane %v818, %v821
      %v823 = vmul.f32 %v803, %v822
      %v824 = vmul.f32 %v805, %v822
      %v825 = vmul.f32 %v807, %v822
      %v826 = vmul.f32 %v809, %v822
      %v827 = vmul.f32 %v811, %v822
      %v828 = vmul.f32 %v813, %v822
      %v829 = vmul.f32 %v815, %v822
      %v830 = vmul.f32 %v817, %v822
      %v831 = vadd.f32 %v794, %v823
      %v832 = vadd.f32 %v795, %v824
      %v833 = vadd.f32 %v796, %v825
      %v834 = vadd.f32 %v797, %v826
      %v835 = vadd.f32 %v798, %v827
      %v836 = vadd.f32 %v799, %v828
      %v837 = vadd.f32 %v800, %v829
      %v838 = vadd.f32 %v801, %v830
      %s839 = scalar_lea.vmem [#allocation2], 2
      %v840 = vld [vmem:[%s839] ss:$2 sm:$0xff]
      %s841 = scalar_lea.vmem [#allocation2], 50
      %v842 = vld [vmem:[%s841] ss:$2 sm:$0xff]
      %s843 = scalar_lea.vmem [#allocation2], 98
      %v844 = vld [vmem:[%s843] ss:$2 sm:$0xff]
      %s845 = scalar_lea.vmem [#allocation2], 146
      %v846 = vld [vmem:[%s845] ss:$2 sm:$0xff]
      %s847 = scalar_lea.vmem [#allocation2], 194
      %v848 = vld [vmem:[%s847] ss:$2 sm:$0xff]
      %s849 = scalar_lea.vmem [#allocation2], 242
      %v850 = vld [vmem:[%s849] ss:$2 sm:$0xff]
      %s851 = scalar_lea.vmem [#allocation2], 290
      %v852 = vld [vmem:[%s851] ss:$2 sm:$0xff]
      %s853 = scalar_lea.vmem [#allocation2], 338
      %v854 = vld [vmem:[%s853] ss:$2 sm:$0xff]
      %v855 = vld [vmem:[%s3 + $0x2] sm:$0x1]
      %v856 = vlaneseq
      %v857 = vshrl.u32 %v856, 7
      %v858 = vsub.s32 0, %v857
      %v859 = vrot.slane %v855, %v858
      %v860 = vmul.f32 %v840, %v859
      %v861 = vmul.f32 %v842, %v859
      %v862 = vmul.f32 %v844, %v859
      %v863 = vmul.f32 %v846, %v859
      %v864 = vmul.f32 %v848, %v859
      %v865 = vmul.f32 %v850, %v859
      %v866 = vmul.f32 %v852, %v859
      %v867 = vmul.f32 %v854, %v859
      %v868 = vadd.f32 %v831, %v860
      %v869 = vadd.f32 %v832, %v861
      %v870 = vadd.f32 %v833, %v862
      %v871 = vadd.f32 %v834, %v863
      %v872 = vadd.f32 %v835, %v864
      %v873 = vadd.f32 %v836, %v865
      %v874 = vadd.f32 %v837, %v866
      %v875 = vadd.f32 %v838, %v867
      %v876 = vld [vmem:[%s733] ss:$2 sm:$0xff]
      %s877 = scalar_lea.vmem %s733, 48 [#allocation2]
      %v878 = vld [vmem:[%s877] ss:$2 sm:$0xff]
      %s879 = scalar_lea.vmem %s733, 96 [#allocation2]
      %v880 = vld [vmem:[%s879] ss:$2 sm:$0xff]
      %s881 = scalar_lea.vmem %s733, 144 [#allocation2]
      %v882 = vld [vmem:[%s881] ss:$2 sm:$0xff]
      %s883 = scalar_lea.vmem %s733, 192 [#allocation2]
      %v884 = vld [vmem:[%s883] ss:$2 sm:$0xff]
      %s885 = scalar_lea.vmem %s733, 240 [#allocation2]
      %v886 = vld [vmem:[%s885] ss:$2 sm:$0xff]
      %s887 = scalar_lea.vmem %s733, 288 [#allocation2]
      %v888 = vld [vmem:[%s887] ss:$2 sm:$0xff]
      %s889 = scalar_lea.vmem %s733, 336 [#allocation2]
      %v890 = vld [vmem:[%s889] ss:$2 sm:$0xff]
      %v891 = vld [vmem:[%s3 + $0x3] sm:$0x1]
      %v892 = vlaneseq
      %v893 = vshrl.u32 %v892, 7
      %v894 = vsub.s32 0, %v893
      %v895 = vrot.slane %v891, %v894
      %v896 = vmul.f32 %v876, %v895
      %v897 = vmul.f32 %v878, %v895
      %v898 = vmul.f32 %v880, %v895
      %v899 = vmul.f32 %v882, %v895
      %v900 = vmul.f32 %v884, %v895
      %v901 = vmul.f32 %v886, %v895
      %v902 = vmul.f32 %v888, %v895
      %v903 = vmul.f32 %v890, %v895
      %v904 = vadd.f32 %v868, %v896
      %v905 = vadd.f32 %v869, %v897
      %v906 = vadd.f32 %v870, %v898
      %v907 = vadd.f32 %v871, %v899
      %v908 = vadd.f32 %v872, %v900
      %v909 = vadd.f32 %v873, %v901
      %v910 = vadd.f32 %v874, %v902
      %v911 = vadd.f32 %v875, %v903
      %s912 = scalar_lea.vmem %s733, 1 [#allocation2]
      %v913 = vld [vmem:[%s912] ss:$2 sm:$0xff]
      %s914 = scalar_lea.vmem %s733, 49 [#allocation2]
      %v915 = vld [vmem:[%s914] ss:$2 sm:$0xff]
      %s916 = scalar_lea.vmem %s733, 97 [#allocation2]
      %v917 = vld [vmem:[%s916] ss:$2 sm:$0xff]
      %s918 = scalar_lea.vmem %s733, 145 [#allocation2]
      %v919 = vld [vmem:[%s918] ss:$2 sm:$0xff]
      %s920 = scalar_lea.vmem %s733, 193 [#allocation2]
      %v921 = vld [vmem:[%s920] ss:$2 sm:$0xff]
      %s922 = scalar_lea.vmem %s733, 241 [#allocation2]
      %v923 = vld [vmem:[%s922] ss:$2 sm:$0xff]
      %s924 = scalar_lea.vmem %s733, 289 [#allocation2]
      %v925 = vld [vmem:[%s924] ss:$2 sm:$0xff]
      %s926 = scalar_lea.vmem %s733, 337 [#allocation2]
      %v927 = vld [vmem:[%s926] ss:$2 sm:$0xff]
      %v928 = vld [vmem:[%s3 + $0x4] sm:$0x1]
      %v929 = vlaneseq
      %v930 = vshrl.u32 %v929, 7
      %v931 = vsub.s32 0, %v930
      %v932 = vrot.slane %v928, %v931
      %v933 = vmul.f32 %v913, %v932
      %v934 = vmul.f32 %v915, %v932
      %v935 = vmul.f32 %v917, %v932
      %v936 = vmul.f32 %v919, %v932
      %v937 = vmul.f32 %v921, %v932
      %v938 = vmul.f32 %v923, %v932
      %v939 = vmul.f32 %v925, %v932
      %v940 = vmul.f32 %v927, %v932
      %v941 = vadd.f32 %v904, %v933
      %v942 = vadd.f32 %v905, %v934
      %v943 = vadd.f32 %v906, %v935
      %v944 = vadd.f32 %v907, %v936
      %v945 = vadd.f32 %v908, %v937
      %v946 = vadd.f32 %v909, %v938
      %v947 = vadd.f32 %v910, %v939
      %v948 = vadd.f32 %v911, %v940
      %s949 = scalar_lea.vmem %s733, 2 [#allocation2]
      %v950 = vld [vmem:[%s949] ss:$2 sm:$0xff]
      %s951 = scalar_lea.vmem %s733, 50 [#allocation2]
      %v952 = vld [vmem:[%s951] ss:$2 sm:$0xff]
      %s953 = scalar_lea.vmem %s733, 98 [#allocation2]
      %v954 = vld [vmem:[%s953] ss:$2 sm:$0xff]
      %s955 = scalar_lea.vmem %s733, 146 [#allocation2]
      %v956 = vld [vmem:[%s955] ss:$2 sm:$0xff]
      %s957 = scalar_lea.vmem %s733, 194 [#allocation2]
      %v958 = vld [vmem:[%s957] ss:$2 sm:$0xff]
      %s959 = scalar_lea.vmem %s733, 242 [#allocation2]
      %v960 = vld [vmem:[%s959] ss:$2 sm:$0xff]
      %s961 = scalar_lea.vmem %s733, 290 [#allocation2]
      %v962 = vld [vmem:[%s961] ss:$2 sm:$0xff]
      %s963 = scalar_lea.vmem %s733, 338 [#allocation2]
      %v964 = vld [vmem:[%s963] ss:$2 sm:$0xff]
      %v965 = vld [vmem:[%s3 + $0x5] sm:$0x1]
      %v966 = vlaneseq
      %v967 = vshrl.u32 %v966, 7
      %v968 = vsub.s32 0, %v967
      %v969 = vrot.slane %v965, %v968
      %v970 = vmul.f32 %v950, %v969
      %v971 = vmul.f32 %v952, %v969
      %v972 = vmul.f32 %v954, %v969
      %v973 = vmul.f32 %v956, %v969
      %v974 = vmul.f32 %v958, %v969
      %v975 = vmul.f32 %v960, %v969
      %v976 = vmul.f32 %v962, %v969
      %v977 = vmul.f32 %v964, %v969
      %v978 = vadd.f32 %v941, %v970
      %v979 = vadd.f32 %v942, %v971
      %v980 = vadd.f32 %v943, %v972
      %v981 = vadd.f32 %v944, %v973
      %v982 = vadd.f32 %v945, %v974
      %v983 = vadd.f32 %v946, %v975
      %v984 = vadd.f32 %v947, %v976
      %v985 = vadd.f32 %v948, %v977
      %s986 = scalar_lea.vmem [#allocation2], 48
      %v987 = vld [vmem:[%s986] ss:$2 sm:$0xff]
      %s988 = scalar_lea.vmem %s986, 48 [#allocation2]
      %v989 = vld [vmem:[%s988] ss:$2 sm:$0xff]
      %s990 = scalar_lea.vmem %s986, 96 [#allocation2]
      %v991 = vld [vmem:[%s990] ss:$2 sm:$0xff]
      %s992 = scalar_lea.vmem %s986, 144 [#allocation2]
      %v993 = vld [vmem:[%s992] ss:$2 sm:$0xff]
      %s994 = scalar_lea.vmem %s986, 192 [#allocation2]
      %v995 = vld [vmem:[%s994] ss:$2 sm:$0xff]
      %s996 = scalar_lea.vmem %s986, 240 [#allocation2]
      %v997 = vld [vmem:[%s996] ss:$2 sm:$0xff]
      %s998 = scalar_lea.vmem %s986, 288 [#allocation2]
      %v999 = vld [vmem:[%s998] ss:$2 sm:$0xff]
      %s1000 = scalar_lea.vmem %s986, 336 [#allocation2]
      %v1001 = vld [vmem:[%s1000] ss:$2 sm:$0xff]
      %v1002 = vld [vmem:[%s3 + $0x6] sm:$0x1]
      %v1003 = vlaneseq
      %v1004 = vshrl.u32 %v1003, 7
      %v1005 = vsub.s32 0, %v1004
      %v1006 = vrot.slane %v1002, %v1005
      %v1007 = vmul.f32 %v987, %v1006
      %v1008 = vmul.f32 %v989, %v1006
      %v1009 = vmul.f32 %v991, %v1006
      %v1010 = vmul.f32 %v993, %v1006
      %v1011 = vmul.f32 %v995, %v1006
      %v1012 = vmul.f32 %v997, %v1006
      %v1013 = vmul.f32 %v999, %v1006
      %v1014 = vmul.f32 %v1001, %v1006
      %v1015 = vadd.f32 %v978, %v1007
      %v1016 = vadd.f32 %v979, %v1008
      %v1017 = vadd.f32 %v980, %v1009
      %v1018 = vadd.f32 %v981, %v1010
      %v1019 = vadd.f32 %v982, %v1011
      %v1020 = vadd.f32 %v983, %v1012
      %v1021 = vadd.f32 %v984, %v1013
      %v1022 = vadd.f32 %v985, %v1014
      %s1023 = scalar_lea.vmem %s986, 1 [#allocation2]
      %v1024 = vld [vmem:[%s1023] ss:$2 sm:$0xff]
      %s1025 = scalar_lea.vmem %s986, 49 [#allocation2]
      %v1026 = vld [vmem:[%s1025] ss:$2 sm:$0xff]
      %s1027 = scalar_lea.vmem %s986, 97 [#allocation2]
      %v1028 = vld [vmem:[%s1027] ss:$2 sm:$0xff]
      %s1029 = scalar_lea.vmem %s986, 145 [#allocation2]
      %v1030 = vld [vmem:[%s1029] ss:$2 sm:$0xff]
      %s1031 = scalar_lea.vmem %s986, 193 [#allocation2]
      %v1032 = vld [vmem:[%s1031] ss:$2 sm:$0xff]
      %s1033 = scalar_lea.vmem %s986, 241 [#allocation2]
      %v1034 = vld [vmem:[%s1033] ss:$2 sm:$0xff]
      %s1035 = scalar_lea.vmem %s986, 289 [#allocation2]
      %v1036 = vld [vmem:[%s1035] ss:$2 sm:$0xff]
      %s1037 = scalar_lea.vmem %s986, 337 [#allocation2]
      %v1038 = vld [vmem:[%s1037] ss:$2 sm:$0xff]
      %v1039 = vld [vmem:[%s3 + $0x7] sm:$0x1]
      %v1040 = vlaneseq
      %v1041 = vshrl.u32 %v1040, 7
      %v1042 = vsub.s32 0, %v1041
      %v1043 = vrot.slane %v1039, %v1042
      %v1044 = vmul.f32 %v1024, %v1043
      %v1045 = vmul.f32 %v1026, %v1043
      %v1046 = vmul.f32 %v1028, %v1043
      %v1047 = vmul.f32 %v1030, %v1043
      %v1048 = vmul.f32 %v1032, %v1043
      %v1049 = vmul.f32 %v1034, %v1043
      %v1050 = vmul.f32 %v1036, %v1043
      %v1051 = vmul.f32 %v1038, %v1043
      %v1052 = vadd.f32 %v1015, %v1044
      %v1053 = vadd.f32 %v1016, %v1045
      %v1054 = vadd.f32 %v1017, %v1046
      %v1055 = vadd.f32 %v1018, %v1047
      %v1056 = vadd.f32 %v1019, %v1048
      %v1057 = vadd.f32 %v1020, %v1049
      %v1058 = vadd.f32 %v1021, %v1050
      %v1059 = vadd.f32 %v1022, %v1051
      %s1060 = scalar_lea.vmem %s986, 2 [#allocation2]
      %v1061 = vld [vmem:[%s1060] ss:$2 sm:$0xff]
      %s1062 = scalar_lea.vmem %s986, 50 [#allocation2]
      %v1063 = vld [vmem:[%s1062] ss:$2 sm:$0xff]
      %s1064 = scalar_lea.vmem %s986, 98 [#allocation2]
      %v1065 = vld [vmem:[%s1064] ss:$2 sm:$0xff]
      %s1066 = scalar_lea.vmem %s986, 146 [#allocation2]
      %v1067 = vld [vmem:[%s1066] ss:$2 sm:$0xff]
      %s1068 = scalar_lea.vmem %s986, 194 [#allocation2]
      %v1069 = vld [vmem:[%s1068] ss:$2 sm:$0xff]
      %s1070 = scalar_lea.vmem %s986, 242 [#allocation2]
      %v1071 = vld [vmem:[%s1070] ss:$2 sm:$0xff]
      %s1072 = scalar_lea.vmem %s986, 290 [#allocation2]
      %v1073 = vld [vmem:[%s1072] ss:$2 sm:$0xff]
      %s1074 = scalar_lea.vmem %s986, 338 [#allocation2]
      %v1075 = vld [vmem:[%s1074] ss:$2 sm:$0xff]
      %v1076 = vld [vmem:[%s3 + $0x8] sm:$0x1]
      %v1077 = vlaneseq
      %v1078 = vshrl.u32 %v1077, 7
      %v1079 = vsub.s32 0, %v1078
      %v1080 = vrot.slane %v1076, %v1079
      %v1081 = vmul.f32 %v1061, %v1080
      %v1082 = vmul.f32 %v1063, %v1080
      %v1083 = vmul.f32 %v1065, %v1080
      %v1084 = vmul.f32 %v1067, %v1080
      %v1085 = vmul.f32 %v1069, %v1080
      %v1086 = vmul.f32 %v1071, %v1080
      %v1087 = vmul.f32 %v1073, %v1080
      %v1088 = vmul.f32 %v1075, %v1080
      %v1089 = vadd.f32 %v1052, %v1081
      %v1090 = vadd.f32 %v1053, %v1082
      %v1091 = vadd.f32 %v1054, %v1083
      %v1092 = vadd.f32 %v1055, %v1084
      %v1093 = vadd.f32 %v1056, %v1085
      %v1094 = vadd.f32 %v1057, %v1086
      %v1095 = vadd.f32 %v1058, %v1087
      %v1096 = vadd.f32 %v1059, %v1088
      %v1097 = vld [vmem:[%s4] sm:$0x1]
      %v1099 = vlaneseq
      %v1100 = vshrl.u32 %v1099, 7
      %v1101 = vsub.s32 0, %v1100
      %v1102 = vrot.slane %v1097, %v1101
      %v1104 = vadd.f32 %v1089, %v1102
      %v1105 = vadd.f32 %v1090, %v1102
      %v1106 = vadd.f32 %v1091, %v1102
      %v1107 = vadd.f32 %v1092, %v1102
      %v1108 = vadd.f32 %v1093, %v1102
      %v1109 = vadd.f32 %v1094, %v1102
      %v1110 = vadd.f32 %v1095, %v1102
      %v1111 = vadd.f32 %v1096, %v1102
      %v1112 = vld [vmem:[%s5] sm:$0xff]
      %v1113 = vld [vmem:[%s6] sm:$0x1]
      %v1115 = vlaneseq
      %v1116 = vshrl.u32 %v1115, 7
      %v1117 = vsub.s32 0, %v1116
      %v1118 = vrot.slane %v1113, %v1117
      %v1121 = vsel %vm677, %v1104, 0
      %v1124 = vsel %vm677, %v1105, 0
      %v1127 = vsel %vm677, %v1106, 0
      %v1130 = vsel %vm677, %v1107, 0
      %v1133 = vsel %vm677, %v1108, 0
      %v1136 = vsel %vm677, %v1109, 0
      %v1139 = vsel %vm677, %v1110, 0
      %v1142 = vsel %vm677, %v1111, 0
      %1144 = vmatprep.subr.mxu0 0.0
      %1145 = vmatpush1.msra.mxu0 %v1112
      %1146 = vmatprep.subr.mxu0 0.0
      %1147 = vmatpush1.msra.mxu0 0.0
      %1148 = vmatprep.subr.mxu0 0.0
      %1149 = vmatpush1.msra.mxu0 0.0
      %1150 = vmatprep.subr.mxu0 0.0
      %1151 = vmatpush1.msra.mxu0 0.0
      %1152 = vmatprep.subr.mxu0 0.0
      %1153 = vmatpush1.msra.mxu0 0.0
      %1154 = vmatprep.subr.mxu0 0.0
      %1155 = vmatpush1.msra.mxu0 0.0
      %1156 = vmatprep.subr.mxu0 0.0
      %1157 = vmatpush1.msra.mxu0 0.0
      %1158 = vmatprep.subr.mxu0 0.0
      %1159 = vmatpush1.msra.mxu0 0.0
      %1160 = vmatprep.subr.mxu0 0.0
      %1161 = vmatpush1.msra.mxu0 0.0
      %1162 = vmatprep.subr.mxu0 0.0
      %1163 = vmatpush1.msra.mxu0 0.0
      %1164 = vmatprep.subr.mxu0 0.0
      %1165 = vmatpush1.msra.mxu0 0.0
      %1166 = vmatprep.subr.mxu0 0.0
      %1167 = vmatpush1.msra.mxu0 0.0
      %1168 = vmatprep.subr.mxu0 0.0
      %1169 = vmatpush1.msra.mxu0 0.0
      %1170 = vmatprep.subr.mxu0 0.0
      %1171 = vmatpush1.msra.mxu0 0.0
      %1172 = vmatprep.subr.mxu0 0.0
      %1173 = vmatpush1.msra.mxu0 0.0
      %1174 = vmatprep.subr.mxu0 0.0
      %1175 = vmatpush1.msra.mxu0 0.0
      %1176 = vmatprep.subr.mxu0 0.0
      %1177 = vmatpush1.msra.mxu0 0.0
      %1178 = vmatprep.subr.mxu0 0.0
      %1179 = vmatpush1.msra.mxu0 0.0
      %1180 = vmatprep.subr.mxu0 0.0
      %1181 = vmatpush1.msra.mxu0 0.0
      %1182 = vmatprep.subr.mxu0 0.0
      %1183 = vmatpush1.msra.mxu0 0.0
      %1184 = vmatprep.subr.mxu0 0.0
      %1185 = vmatpush1.msra.mxu0 0.0
      %1186 = vmatprep.subr.mxu0 0.0
      %1187 = vmatpush1.msra.mxu0 0.0
      %1188 = vmatprep.subr.mxu0 0.0
      %1189 = vmatpush1.msra.mxu0 0.0
      %1190 = vmatprep.subr.mxu0 0.0
      %1191 = vmatpush1.msra.mxu0 0.0
      %1192 = vmatprep.subr.mxu0 0.0
      %1193 = vmatpush1.msra.mxu0 0.0
      %1194 = vmatprep.subr.mxu0 0.0
      %1195 = vmatpush1.msra.mxu0 0.0
      %1196 = vmatprep.subr.mxu0 0.0
      %1197 = vmatpush1.msra.mxu0 0.0
      %1198 = vmatprep.subr.mxu0 0.0
      %1199 = vmatpush1.msra.mxu0 0.0
      %1200 = vmatprep.subr.mxu0 0.0
      %1201 = vmatpush1.msra.mxu0 0.0
      %1202 = vmatprep.subr.mxu0 0.0
      %1203 = vmatpush1.msra.mxu0 0.0
      %1204 = vmatprep.subr.mxu0 0.0
      %1205 = vmatpush1.msra.mxu0 0.0
      %1206 = vmatprep.subr.mxu0 0.0
      %1207 = vmatpush1.msra.mxu0 0.0
      %1208 = vmatprep.mubr.f32.mxu0 0.0
      %1209 = vmatmul.mubr.f32.gmra.mrb[0].mxu0 %v1121
      %v1210 = vpop.f32.mrb[0].mxu0
      %v1211 = vadd.f32 %v1118, %v1210
      %v1212 = vpop.f32.mrb[0].mxu0
      %1213 = vmatprep.mubr.f32.mxu0 0.0
      %1214 = vmatmul.mubr.f32.gmra.mrb[0].mxu0 %v1124
      %v1215 = vpop.f32.mrb[0].mxu0
      %v1216 = vadd.f32 %v1118, %v1215
      %v1217 = vpop.f32.mrb[0].mxu0
      %1218 = vmatprep.mubr.f32.mxu0 0.0
      %1219 = vmatmul.mubr.f32.gmra.mrb[0].mxu0 %v1127
      %v1220 = vpop.f32.mrb[0].mxu0
      %v1221 = vadd.f32 %v1118, %v1220
      %v1222 = vpop.f32.mrb[0].mxu0
      %1223 = vmatprep.mubr.f32.mxu0 0.0
      %1224 = vmatmul.mubr.f32.gmra.mrb[0].mxu0 %v1130
      %v1225 = vpop.f32.mrb[0].mxu0
      %v1226 = vadd.f32 %v1118, %v1225
      %v1227 = vpop.f32.mrb[0].mxu0
      %1228 = vmatprep.mubr.f32.mxu0 0.0
      %1229 = vmatmul.mubr.f32.gmra.mrb[0].mxu0 %v1133
      %v1230 = vpop.f32.mrb[0].mxu0
      %v1231 = vadd.f32 %v1118, %v1230
      %v1232 = vpop.f32.mrb[0].mxu0
      %1233 = vmatprep.mubr.f32.mxu0 0.0
      %1234 = vmatmul.mubr.f32.gmra.mrb[0].mxu0 %v1136
      %v1235 = vpop.f32.mrb[0].mxu0
      %v1236 = vadd.f32 %v1118, %v1235
      %v1237 = vpop.f32.mrb[0].mxu0
      %1238 = vmatprep.mubr.f32.mxu0 0.0
      %1239 = vmatmul.mubr.f32.gmra.mrb[0].mxu0 %v1139
      %v1240 = vpop.f32.mrb[0].mxu0
      %v1241 = vadd.f32 %v1118, %v1240
      %v1242 = vpop.f32.mrb[0].mxu0
      %1243 = vmatprep.mubr.f32.mxu0 0.0
      %1244 = vmatmul.mubr.f32.gmra.mrb[0].mxu0 %v1142
      %v1245 = vpop.f32.mrb[0].mxu0
      %v1246 = vadd.f32 %v1118, %v1245
      %v1247 = vpop.f32.mrb[0].mxu0
      %1248 = vdwg.mxu0
      %v1249 = vmax.f32 %v1211, 0.0
      %v1250 = vmax.f32 %v1216, 0.0
      %v1251 = vmax.f32 %v1221, 0.0
      %v1252 = vmax.f32 %v1226, 0.0
      %v1253 = vmax.f32 %v1231, 0.0
      %v1254 = vmax.f32 %v1236, 0.0
      %v1255 = vmax.f32 %v1241, 0.0
      %v1256 = vmax.f32 %v1246, 0.0
      %1257 = vst.msk [vmem:[%s278] sm:$0xff] %vm677, %v1249
      %1258 = vst.msk [vmem:[%s278 + $0x8] sm:$0xff] %vm677, %v1250
      %1259 = vst.msk [vmem:[%s278 + $0x10] sm:$0xff] %vm677, %v1251
      %1260 = vst.msk [vmem:[%s278 + $0x18] sm:$0xff] %vm677, %v1252
      %1261 = vst.msk [vmem:[%s278 + $0x20] sm:$0xff] %vm677, %v1253
      %1262 = vst.msk [vmem:[%s278 + $0x28] sm:$0xff] %vm677, %v1254
      %1263 = vst.msk [vmem:[%s278 + $0x30] sm:$0xff] %vm677, %v1255
      %1264 = vst.msk [vmem:[%s278 + $0x38] sm:$0xff] %vm677, %v1256
      %p1265 = scmp.lt.s32.totalorder %s18, 1
      %s1266 = scalar_select %p1265, %s18, 1
      %s1267 = smul.addr %s1266, 8
      %s1268 = smul.addr %s1267, 8
      %s1269 = scalar_lea.vmem %s7, %s1268
      // Predicated region
      $region49: #{inverted_residual_forward.3} parent=47 // pred_check
        %p1270 = pneg %p188
      $region50: #{inverted_residual_forward.3} parent=47 // pred_check_branch
        %1272 = sbr.rel (%p1270) target = $region52
      $region51: #{inverted_residual_forward.3} parent=47 // pred_region
        _
      $region52: #{inverted_residual_forward.3} parent=47 // pred_fallthru
        _
    $region48: #{inverted_residual_forward.3} parent=5 // pred_fallthru
      _
    %p1273 = scmp.le.s32.totalorder 2, %s13
    // Predicated region
    $region53: #{inverted_residual_forward.3} parent=5 // pred_check
      %p1274 = pneg %p1273
    $region54: #{inverted_residual_forward.3} parent=5 // pred_check_branch
      %1276 = sbr.rel (%p1274) target = $region56
    $region55: #{inverted_residual_forward.3} parent=5 // pred_region
      %s1277 = ssub.s32 %s13, 2
      // Predicated region
      $region57: #{inverted_residual_forward.3} parent=55 // pred_check
        %p1278 = pneg %p194
      $region58: #{inverted_residual_forward.3} parent=55 // pred_check_branch
        %1280 = sbr.rel (%p1278) target = $region60
      $region59: #{inverted_residual_forward.3} parent=55 // pred_region
        %p1281 = scmp.lt.s32.totalorder %s19, 1
        %s1282 = scalar_select %p1281, %s19, 1
        %s1283 = smul.addr %s1282, 8
        %s1284 = smul.addr %s1283, 8
        %s1285 = scalar_lea.vmem %s7, %s1284
      $region60: #{inverted_residual_forward.3} parent=55 // pred_fallthru
        _
    $region56: #{inverted_residual_forward.3} parent=5 // pred_fallthru
      _
  $region6: #{inverted_residual_forward.3} parent=0 // loop_footer
    %s17 = sadd.s32 1, %s13
  $region7: #{inverted_residual_forward.3} parent=0 // loop_footer_branch
    %12 = sbr.rel target = $region3
  $region8: #{inverted_residual_forward.3} parent=0 // loop_exit
    _

</llo_original>
